<compile_context>
chip_gen: v7x
topology: tpu7x:2x2x1
jax: 0.10.0
libtpu: 0.0.40
codegen_flags: <defaults>
</compile_context>

<pallas_src>
import functools
import math

import jax
import jax.numpy as jnp
import numpy as np
from jax import lax
from jax.experimental import pallas as pl
from jax.experimental.pallas import tpu as pltpu

EPS = 1e-5  # nn.InstanceNorm2d default


# ---------------------------------------------------------------------------
# Host-side weight packing.
# Activation layout: layout-row r holds `fold` consecutive image rows; lane
# l = y_off*W*Cp + x*Cp + c  (channel(l) = l % Cp).  A 3x3 SAME conv becomes
#     conv_out[r] = sum_{dr in {-1,0,1}} act[r+dr] @ bw[dr+1]
# with out-of-range W taps simply absent (== zero padding along W).  The three
# bands are stacked along K on the host so the kernel issues ONE matmul.
# ---------------------------------------------------------------------------
def _banded_conv_matrices(w_hwio, W, fold):
    kh, kw, ci, co = w_hwio.shape
    assert (kh, kw) == (3, 3) and ci == co
    C = ci
    L = fold * W * C
    w = np.asarray(w_hwio, dtype=np.float32)
    bw = np.zeros((3, L, L), dtype=np.float32)
    for dr in (-1, 0, 1):
        for y_out in range(fold):
            for ky in range(3):
                y_in = y_out + (ky - 1) - fold * dr
                if not 0 <= y_in < fold:
                    continue
                for kx in range(3):
                    for x in range(W):
                        x_in = x + (kx - 1)
                        if not 0 <= x_in < W:
                            continue          # W zero-padding folded into weights
                        r0 = (y_in * W + x_in) * C
                        c0 = (y_out * W + x) * C
                        bw[dr + 1, r0:r0 + C, c0:c0 + C] = w[ky, kx]
    return bw


def _pick_layout(H, W, C, lane=128):
    """(fold, padded_C): fold image rows into lanes and/or zero-pad channels so
    the lane width fold*W*Cp is a multiple of 128 (dense, unmasked vregs and
    stores).  Prefers the smallest lane width, then the least channel padding."""
    best = None
    for fold in range(1, H + 1):
        if H % fold:
            continue
        step = lane // math.gcd(fold * W, lane)
        cp = ((C + step - 1) // step) * step
        L = fold * W * cp
        key = (L, cp, -fold)
        if best is None or key < best[0]:
            best = (key, fold, cp)
    return best[1], best[2]


def _pick_bt(B, hl, L, target_m=256, max_act_bytes=4 << 20):
    """Pack Bt batch elements per grid step so the conv-matmul M dim (Bt*hl)
    approaches the MXU height (256 on v6e/v7x) without blowing the VMEM block."""
    best = 1
    for bt in range(1, B + 1):
        if B % bt:
            continue
        if bt * hl > max(target_m, hl):
            continue
        if bt * hl * L * 4 > max_act_bytes:
            continue
        best = bt
    return best


def _vmem_limit_bytes(weight_bytes, bt, hl, L):
    """VMEM budget derived from actual buffer sizes, capped below the physical
    per-core capacity (queried; conservative 64 MiB default matches v7x)."""
    act_block = bt * hl * L * 4
    need = 2 * weight_bytes            # grid-invariant inputs (double-buffered by default)
    need += 2 * 2 * act_block          # in + out activation blocks, double-buffered
    need += bt * (hl + 2) * L * 4      # pad scratch
    need += 8 << 20                    # working values / spill headroom
    phys = 64 << 20                    # conservative default (v7x per-core VMEM)
    try:
        phys = int(pltpu.get_tpu_info().vmem_capacity_bytes)
    except Exception:
        pass
    return int(min(max(need, 32 << 20), int(0.85 * phys)))


# ---------------------------------------------------------------------------
# Fused kernel: one grid step == Bt batch elements, all residual blocks in VMEM.
# ---------------------------------------------------------------------------
def _resblocks_kernel(x_ref, w1_ref, w2_ref, stats_ref, o_ref, pad_ref, *,
                      bt, hl, lanes, num_blocks):
    # x_ref     : (bt, hl, L)        lane-dense activations (L = fold*W*Cp)
    # w*_ref    : (nb, 3L, L)        K-fused banded conv weights (bf16 by default)
    # stats_ref : (2L, 2L) f32       block-diag lane -> per-channel averaging matrix
    # o_ref     : (bt, hl, L)
    # pad_ref   : (bt, hl+2, L) f32  scratch, one zero halo row per image top/bottom
    f32 = jnp.float32
    L = lanes
    mm_dtype = w1_ref.dtype

    # Zero only the halo rows; the interior is fully rewritten before every conv.
    # Done every grid step so it is also megacore-safe.
    zrow = jnp.zeros((bt, 1, L), f32)
    pad_ref[:, 0:1, :] = zrow
    pad_ref[:, hl + 1:hl + 2, :] = zrow

    def conv3x3(w):
        # K-fused im2col along H: LHS row (b, r) = [row r-1 | row r | row r+1];
        # one (bt*hl, 3L) x (3L, L) MXU issue per conv (vs 3 short matmuls).
        lhs = jnp.concatenate(
            [pad_ref[:, 0:hl, :], pad_ref[:, 1:hl + 1, :], pad_ref[:, 2:hl + 2, :]],
            axis=-1)                                           # lane-aligned concat
        lhs = lhs.reshape(bt * hl, 3 * L).astype(mm_dtype)     # single cast per conv
        out = jnp.dot(lhs, w, preferred_element_type=f32)
        return out.reshape(bt, hl, L)

    def instance_norm(v):
        # Per-image, per-channel stats (channel = lane % Cp).  colsum|colsq are
        # stacked along lanes so ONE tiny matmul yields both mean and E[x^2].
        colsum = jnp.sum(v, axis=1)                            # (bt, L)
        colsq = jnp.sum(v * v, axis=1)                         # (bt, L)
        s = jnp.dot(jnp.concatenate([colsum, colsq], axis=-1), stats_ref[...],
                    preferred_element_type=f32)                # (bt, 2L)
        mean = s[:, 0:L].reshape(bt, 1, L)
        ex2 = s[:, L:2 * L].reshape(bt, 1, L)
        var = jnp.maximum(ex2 - mean * mean, 0.0)              # one-pass cancellation guard
        return (v - mean) * lax.rsqrt(var + EPS)

    def res_block(x, w1, w2):
        pad_ref[:, 1:hl + 1, :] = x                            # conv1 source (residual in x)
        h = jnp.maximum(instance_norm(conv3x3(w1)), 0.0)       # IN + ReLU
        pad_ref[:, 1:hl + 1, :] = h                            # conv2 source
        return instance_norm(conv3x3(w2)) + x                  # IN + residual add

    x = x_ref[...].astype(f32)
    if num_blocks >= 4:
        # fori_loop bounds live ranges / code size for deep stacks; weights are
        # dynamically indexed out of the resident VMEM slab.
        x = lax.fori_loop(0, num_blocks,
                          lambda blk, xc: res_block(xc, w1_ref[blk], w2_ref[blk]), x)
    else:
        for blk in range(num_blocks):
            x = res_block(x, w1_ref[blk], w2_ref[blk])
    o_ref[...] = x.astype(o_ref.dtype)


@functools.partial(jax.jit,
                   static_argnames=("h", "w", "cp", "fold", "bt", "vmem_limit"))
def _resblocks_call(x_nchw, bw1, bw2, stats_mat, *, h, w, cp, fold, bt, vmem_limit):
    B, C = x_nchw.shape[0], x_nchw.shape[1]
    nb = bw1.shape[0]
    L = fold * w * cp
    hl = h // fold

    # NCHW -> NHWC -> (zero-pad channels) -> lane-dense (B, H/fold, fold*W*Cp)
    x = jnp.transpose(x_nchw, (0, 2, 3, 1)).astype(jnp.float32)
    if cp != C:
        x = jnp.pad(x, ((0, 0), (0, 0), (0, 0), (0, cp - C)))
    x_lane = x.reshape(B, hl, L)

    kernel = functools.partial(_resblocks_kernel, bt=bt, hl=hl, lanes=L,
                               num_blocks=nb)
    out_lane = pl.pallas_call(
        kernel,
        out_shape=jax.ShapeDtypeStruct((B, hl, L), jnp.float32),
        grid_spec=pltpu.PrefetchScalarGridSpec(
            num_scalar_prefetch=0,
            grid=(B // bt,),                        # bt batch elements per grid step
            in_specs=[
                pl.BlockSpec((bt, hl, L), lambda g: (g, 0, 0)),
                # Grid-invariant weights stay resident in VMEM across the batch.
                pl.BlockSpec((nb, 3 * L, L), lambda g: (0, 0, 0)),
                pl.BlockSpec((nb, 3 * L, L), lambda g: (0, 0, 0)),
                pl.BlockSpec((2 * L, 2 * L), lambda g: (0, 0)),
            ],
            out_specs=pl.BlockSpec((bt, hl, L), lambda g: (g, 0, 0)),
            scratch_shapes=[pltpu.VMEM((bt, hl + 2, L), jnp.float32)],
        ),
        compiler_params=pltpu.CompilerParams(
            dimension_semantics=("parallel",),       # batch steps are independent
            vmem_limit_bytes=vmem_limit,
        ),
    )(x_lane, bw1, bw2, stats_mat)

    out = out_lane.reshape(B, h, w, cp)[..., :C]
    return jnp.transpose(out, (0, 3, 1, 2))          # NHWC -> NCHW


def resblocks_pallas(x_nchw, params, matmul_dtype=jnp.bfloat16):
    """ResBlocks forward (NCHW in/out), faithful to
    ResBlocks(num_blocks, dim, norm='in', activation='relu', pad_type='zero').

    params: list of (w1, b1, w2, b2) per block in PyTorch Conv2d layout
    (weight (C, C, 3, 3) OIHW, bias (C,)).

    Conv biases are dropped: a per-channel constant added right before a
    NON-AFFINE InstanceNorm is an exact no-op.  This fold is only valid for the
    norm='in' configuration implemented here (guard: do not reuse for
    affine/adain/none-norm variants).

    matmul_dtype: jnp.bfloat16 (default; native MXU format, f32 accumulation,
    use a looser tolerance) or jnp.float32 (exact).
    """
    B, C, H, W = x_nchw.shape
    fold, cp = _pick_layout(H, W, C)
    L = fold * W * cp
    hl = H // fold

    bw1, bw2 = [], []
    for (w1, _b1, w2, _b2) in params:
        for wt, dst in ((w1, bw1), (w2, bw2)):
            w_hwio = np.transpose(np.asarray(wt, dtype=np.float32), (2, 3, 1, 0))
            if cp != C:
                w_hwio = np.pad(w_hwio, ((0, 0), (0, 0), (0, cp - C), (0, cp - C)))
            dst.append(_banded_conv_matrices(w_hwio, W, fold).reshape(3 * L, L))
    bw1 = jnp.asarray(np.stack(bw1), dtype=matmul_dtype)
    bw2 = jnp.asarray(np.stack(bw2), dtype=matmul_dtype)

    # Block-diagonal lane -> per-channel averaging matrix (host-side numpy):
    #   [colsum | colsq] @ S -> [per-channel mean | per-channel E[x^2]]
    lane_ch = np.arange(L) % cp
    avg = (lane_ch[:, None] == lane_ch[None, :]).astype(np.float32) / float(H * W)
    S = np.zeros((2 * L, 2 * L), np.float32)
    S[:L, :L] = avg
    S[L:, L:] = avg
    stats_mat = jnp.asarray(S)

    bt = _pick_bt(B, hl, L)
    weight_bytes = ((bw1.size + bw2.size) * bw1.dtype.itemsize
                    + stats_mat.size * 4)
    vmem_limit = _vmem_limit_bytes(weight_bytes, bt, hl, L)
    return _resblocks_call(x_nchw, bw1, bw2, stats_mat,
                           h=H, w=W, cp=cp, fold=fold, bt=bt,
                           vmem_limit=vmem_limit)


# ---------------- pure-JAX reference (faithful to the PyTorch module) ----------------
def _conv_same(x_nhwc, w_oihw, b):
    w_hwio = jnp.transpose(w_oihw, (2, 3, 1, 0))
    y = lax.conv_general_dilated(x_nhwc, w_hwio, (1, 1), "SAME",
                                 dimension_numbers=("NHWC", "HWIO", "NHWC"))
    return y + b[None, None, None, :]


def _inorm(x):
    mean = jnp.mean(x, axis=(1, 2), keepdims=True)
    var = jnp.mean((x - mean) ** 2, axis=(1, 2), keepdims=True)
    return (x - mean) * lax.rsqrt(var + EPS)


def resblocks_ref(x_nchw, params):
    x = jnp.transpose(x_nchw, (0, 2, 3, 1)).astype(jnp.float32)
    for (w1, b1, w2, b2) in params:
        h = jnp.maximum(_inorm(_conv_same(x, w1, b1)), 0.0)
        x = _inorm(_conv_same(h, w2, b2)) + x
    return jnp.transpose(x, (0, 3, 1, 2))


if __name__ == "__main__":
    B, C, H, W = 2, 4, 16, 16

    key = jax.random.PRNGKey(0)
    key, kx = jax.random.split(key)
    x = jax.random.normal(kx, (B, C, H, W), dtype=jnp.float32)

    def make_params(key, n):
        ps = []
        for _ in range(n):
            key, k1, k2, k3, k4 = jax.random.split(key, 5)
            w1 = jax.random.normal(k1, (C, C, 3, 3), dtype=jnp.float32) * 0.2
            b1 = jax.random.normal(k2, (C,), dtype=jnp.float32) * 0.1
            w2 = jax.random.normal(k3, (C, C, 3, 3), dtype=jnp.float32) * 0.2
            b2 = jax.random.normal(k4, (C,), dtype=jnp.float32) * 0.1
            ps.append((w1, b1, w2, b2))
        return key, ps

    # nb=2 exercises the unrolled path; nb=4 exercises the fori_loop path.
    key, params2 = make_params(key, 2)
    key, params4 = make_params(key, 4)

    ref2 = jax.block_until_ready(resblocks_ref(x, params2))
    ref4 = jax.block_until_ready(resblocks_ref(x, params4))

    # bf16 default path (looser tolerance: weights + conv LHS are quantized).
    out2 = jax.block_until_ready(resblocks_pallas(x, params2))
    np.testing.assert_allclose(np.asarray(out2), np.asarray(ref2),
                               rtol=5e-2, atol=1e-1)

    out4 = jax.block_until_ready(resblocks_pallas(x, params4))
    np.testing.assert_allclose(np.asarray(out4), np.asarray(ref4),
                               rtol=5e-2, atol=1e-1)

    # f32 path (exact check).
    out2_f32 = jax.block_until_ready(
        resblocks_pallas(x, params2, matmul_dtype=jnp.float32))
    np.testing.assert_allclose(np.asarray(out2_f32), np.asarray(ref2),
                               rtol=1e-4, atol=1e-4)

    print("KERNEL_OK")
</pallas_src>

<mosaic_0001>
module attributes {stable_mosaic.version = 11 : i64} {
  func.func @_resblocks_kernel(%arg0: i32, %arg1: memref<2x8x128xf32, #tpu.memory_space<vmem>>, %arg2: memref<2x384x128xbf16, #tpu.memory_space<vmem>>, %arg3: memref<2x384x128xbf16, #tpu.memory_space<vmem>>, %arg4: memref<256x256xf32, #tpu.memory_space<vmem>>, %arg5: memref<2x8x128xf32, #tpu.memory_space<vmem>>, %arg6: memref<2x10x128xf32, #tpu.memory_space<vmem>>) attributes {dimension_semantics = [#tpu.dimension_semantics<parallel>], iteration_bounds = array<i64: 1>, scalar_prefetch = 0 : i64, scratch_operands = 1 : i64, tpu.core_type = #tpu.core_type<tc>, window_params = [{transform_indices = @transform_0, window_bounds = array<i64: 2, 8, 128>}, {pipeline_mode = #tpu.pipeline_mode<synchronous>, transform_indices = @transform_1, window_bounds = array<i64: 2, 384, 128>}, {pipeline_mode = #tpu.pipeline_mode<synchronous>, transform_indices = @transform_2, window_bounds = array<i64: 2, 384, 128>}, {pipeline_mode = #tpu.pipeline_mode<synchronous>, transform_indices = @transform_3, window_bounds = array<i64: 256, 256>}, {transform_indices = @transform_4, window_bounds = array<i64: 2, 8, 128>}]} {
    %cst = arith.constant 0.000000e+00 : f32
    %0 = vector.broadcast %cst : f32 to vector<2x1x128xf32>
    %c0 = arith.constant 0 : index
    %c0_0 = arith.constant 0 : index
    %c0_1 = arith.constant 0 : index
    %1 = vector.load %arg6[%c0, %c0_0, %c0_1] : memref<2x10x128xf32, #tpu.memory_space<vmem>>, vector<2x1x128xf32>
    tpu.vector_store %arg6[%c0, %c0_0, %c0_1], %0 {strides = array<i32>} : memref<2x10x128xf32, #tpu.memory_space<vmem>>, vector<2x1x128xf32>,
    %c0_2 = arith.constant 0 : index
    %c9 = arith.constant 9 : index
    %c0_3 = arith.constant 0 : index
    %2 = vector.load %arg6[%c0_2, %c9, %c0_3] : memref<2x10x128xf32, #tpu.memory_space<vmem>>, vector<2x1x128xf32>
    tpu.vector_store %arg6[%c0_2, %c9, %c0_3], %0 {strides = array<i32>} : memref<2x10x128xf32, #tpu.memory_space<vmem>>, vector<2x1x128xf32>,
    %c0_4 = arith.constant 0 : index
    %c0_5 = arith.constant 0 : index
    %c0_6 = arith.constant 0 : index
    %3 = vector.load %arg1[%c0_4, %c0_5, %c0_6] : memref<2x8x128xf32, #tpu.memory_space<vmem>>, vector<2x8x128xf32>
    %c0_7 = arith.constant 0 : index
    %c0_8 = arith.constant 0 : index
    %c0_9 = arith.constant 0 : index
    %4 = vector.load %arg2[%c0_7, %c0_8, %c0_9] : memref<2x384x128xbf16, #tpu.memory_space<vmem>>, vector<1x384x128xbf16>
    %5 = vector.shape_cast %4 : vector<1x384x128xbf16> to vector<384x128xbf16>
    %c0_10 = arith.constant 0 : index
    %c0_11 = arith.constant 0 : index
    %c0_12 = arith.constant 0 : index
    %6 = vector.load %arg3[%c0_10, %c0_11, %c0_12] : memref<2x384x128xbf16, #tpu.memory_space<vmem>>, vector<1x384x128xbf16>
    %7 = vector.shape_cast %6 : vector<1x384x128xbf16> to vector<384x128xbf16>
    %c0_13 = arith.constant 0 : index
    %c1 = arith.constant 1 : index
    %c0_14 = arith.constant 0 : index
    %8 = vector.load %arg6[%c0_13, %c1, %c0_14] : memref<2x10x128xf32, #tpu.memory_space<vmem>>, vector<2x8x128xf32>
    tpu.vector_store %arg6[%c0_13, %c1, %c0_14], %3 {strides = array<i32>} : memref<2x10x128xf32, #tpu.memory_space<vmem>>, vector<2x8x128xf32>,
    %c0_15 = arith.constant 0 : index
    %c0_16 = arith.constant 0 : index
    %c0_17 = arith.constant 0 : index
    %9 = vector.load %arg6[%c0_15, %c0_16, %c0_17] : memref<2x10x128xf32, #tpu.memory_space<vmem>>, vector<2x8x128xf32>
    %c0_18 = arith.constant 0 : index
    %c1_19 = arith.constant 1 : index
    %c0_20 = arith.constant 0 : index
    %10 = vector.load %arg6[%c0_18, %c1_19, %c0_20] : memref<2x10x128xf32, #tpu.memory_space<vmem>>, vector<2x8x128xf32>
    %c0_21 = arith.constant 0 : index
    %c2 = arith.constant 2 : index
    %c0_22 = arith.constant 0 : index
    %11 = vector.load %arg6[%c0_21, %c2, %c0_22] : memref<2x10x128xf32, #tpu.memory_space<vmem>>, vector<2x8x128xf32>
    %12 = tpu.concatenate %9, %10, %11 in 2 : vector<2x8x128xf32>, vector<2x8x128xf32>, vector<2x8x128xf32> -> vector<2x8x384xf32>
    %13 = vector.shape_cast %12 : vector<2x8x384xf32> to vector<16x384xf32>
    %14 = arith.truncf %13 : vector<16x384xf32> to vector<16x384xbf16>
    %cst_23 = arith.constant dense<0.000000e+00> : vector<16x128xf32>
    %15 = tpu.matmul %14, %5, %cst_23 {dimension_numbers = #tpu.dot_dimension_numbers<[1], [0], [0], [1], [0, 0, 1, 1], [], []>} : vector<16x384xbf16>, vector<384x128xbf16>, vector<16x128xf32> -> vector<16x128xf32>
    %16 = vector.shape_cast %15 : vector<16x128xf32> to vector<2x8x128xf32>
    %cst_24 = arith.constant dense<0.000000e+00> : vector<2x128xf32>
    %17 = vector.multi_reduction <add>, %16, %cst_24 [1] : vector<2x8x128xf32> to vector<2x128xf32>
    %18 = arith.mulf %16, %16 : vector<2x8x128xf32>
    %cst_25 = arith.constant dense<0.000000e+00> : vector<2x128xf32>
    %19 = vector.multi_reduction <add>, %18, %cst_25 [1] : vector<2x8x128xf32> to vector<2x128xf32>
    %20 = tpu.concatenate %17, %19 in 1 : vector<2x128xf32>, vector<2x128xf32> -> vector<2x256xf32>
    %c0_26 = arith.constant 0 : index
    %c0_27 = arith.constant 0 : index
    %21 = vector.load %arg4[%c0_26, %c0_27] : memref<256x256xf32, #tpu.memory_space<vmem>>, vector<256x256xf32>
    %cst_28 = arith.constant dense<0.000000e+00> : vector<2x256xf32>
    %22 = tpu.matmul %20, %21, %cst_28 {dimension_numbers = #tpu.dot_dimension_numbers<[1], [0], [0], [1], [0, 0, 1, 1], [], []>} : vector<2x256xf32>, vector<256x256xf32>, vector<2x256xf32> -> vector<2x256xf32>
    %23 = vector.extract_strided_slice %22 {offsets = [0, 0], sizes = [2, 128], strides = [1, 1]} : vector<2x256xf32> to vector<2x128xf32>
    %24 = vector.shape_cast %23 : vector<2x128xf32> to vector<2x1x128xf32>
    %25 = vector.extract_strided_slice %22 {offsets = [0, 128], sizes = [2, 128], strides = [1, 1]} : vector<2x256xf32> to vector<2x128xf32>
    %26 = vector.shape_cast %25 : vector<2x128xf32> to vector<2x1x128xf32>
    %27 = arith.mulf %24, %24 : vector<2x1x128xf32>
    %28 = arith.subf %26, %27 : vector<2x1x128xf32>
    %cst_29 = arith.constant 0.000000e+00 : f32
    %29 = vector.broadcast %cst_29 : f32 to vector<2x1x128xf32>
    %30 = arith.maximumf %28, %29 : vector<2x1x128xf32>
    %31 = vector.broadcast %24 : vector<2x1x128xf32> to vector<2x8x128xf32>
    %32 = arith.subf %16, %31 : vector<2x8x128xf32>
    %cst_30 = arith.constant 9.99999974E-6 : f32
    %33 = vector.broadcast %cst_30 : f32 to vector<2x1x128xf32>
    %34 = arith.addf %30, %33 : vector<2x1x128xf32>
    %35 = math.rsqrt %34 : vector<2x1x128xf32>
    %36 = vector.broadcast %35 : vector<2x1x128xf32> to vector<2x8x128xf32>
    %37 = arith.mulf %32, %36 : vector<2x8x128xf32>
    %cst_31 = arith.constant 0.000000e+00 : f32
    %38 = vector.broadcast %cst_31 : f32 to vector<2x8x128xf32>
    %39 = arith.maximumf %37, %38 : vector<2x8x128xf32>
    %c0_32 = arith.constant 0 : index
    %c1_33 = arith.constant 1 : index
    %c0_34 = arith.constant 0 : index
    %40 = vector.load %arg6[%c0_32, %c1_33, %c0_34] : memref<2x10x128xf32, #tpu.memory_space<vmem>>, vector<2x8x128xf32>
    tpu.vector_store %arg6[%c0_32, %c1_33, %c0_34], %39 {strides = array<i32>} : memref<2x10x128xf32, #tpu.memory_space<vmem>>, vector<2x8x128xf32>,
    %c0_35 = arith.constant 0 : index
    %c0_36 = arith.constant 0 : index
    %c0_37 = arith.constant 0 : index
    %41 = vector.load %arg6[%c0_35, %c0_36, %c0_37] : memref<2x10x128xf32, #tpu.memory_space<vmem>>, vector<2x8x128xf32>
    %c0_38 = arith.constant 0 : index
    %c1_39 = arith.constant 1 : index
    %c0_40 = arith.constant 0 : index
    %42 = vector.load %arg6[%c0_38, %c1_39, %c0_40] : memref<2x10x128xf32, #tpu.memory_space<vmem>>, vector<2x8x128xf32>
    %c0_41 = arith.constant 0 : index
    %c2_42 = arith.constant 2 : index
    %c0_43 = arith.constant 0 : index
    %43 = vector.load %arg6[%c0_41, %c2_42, %c0_43] : memref<2x10x128xf32, #tpu.memory_space<vmem>>, vector<2x8x128xf32>
    %44 = tpu.concatenate %41, %42, %43 in 2 : vector<2x8x128xf32>, vector<2x8x128xf32>, vector<2x8x128xf32> -> vector<2x8x384xf32>
    %45 = vector.shape_cast %44 : vector<2x8x384xf32> to vector<16x384xf32>
    %46 = arith.truncf %45 : vector<16x384xf32> to vector<16x384xbf16>
    %cst_44 = arith.constant dense<0.000000e+00> : vector<16x128xf32>
    %47 = tpu.matmul %46, %7, %cst_44 {dimension_numbers = #tpu.dot_dimension_numbers<[1], [0], [0], [1], [0, 0, 1, 1], [], []>} : vector<16x384xbf16>, vector<384x128xbf16>, vector<16x128xf32> -> vector<16x128xf32>
    %48 = vector.shape_cast %47 : vector<16x128xf32> to vector<2x8x128xf32>
    %cst_45 = arith.constant dense<0.000000e+00> : vector<2x128xf32>
    %49 = vector.multi_reduction <add>, %48, %cst_45 [1] : vector<2x8x128xf32> to vector<2x128xf32>
    %50 = arith.mulf %48, %48 : vector<2x8x128xf32>
    %cst_46 = arith.constant dense<0.000000e+00> : vector<2x128xf32>
    %51 = vector.multi_reduction <add>, %50, %cst_46 [1] : vector<2x8x128xf32> to vector<2x128xf32>
    %52 = tpu.concatenate %49, %51 in 1 : vector<2x128xf32>, vector<2x128xf32> -> vector<2x256xf32>
    %c0_47 = arith.constant 0 : index
    %c0_48 = arith.constant 0 : index
    %53 = vector.load %arg4[%c0_47, %c0_48] : memref<256x256xf32, #tpu.memory_space<vmem>>, vector<256x256xf32>
    %cst_49 = arith.constant dense<0.000000e+00> : vector<2x256xf32>
    %54 = tpu.matmul %52, %53, %cst_49 {dimension_numbers = #tpu.dot_dimension_numbers<[1], [0], [0], [1], [0, 0, 1, 1], [], []>} : vector<2x256xf32>, vector<256x256xf32>, vector<2x256xf32> -> vector<2x256xf32>
    %55 = vector.extract_strided_slice %54 {offsets = [0, 0], sizes = [2, 128], strides = [1, 1]} : vector<2x256xf32> to vector<2x128xf32>
    %56 = vector.shape_cast %55 : vector<2x128xf32> to vector<2x1x128xf32>
    %57 = vector.extract_strided_slice %54 {offsets = [0, 128], sizes = [2, 128], strides = [1, 1]} : vector<2x256xf32> to vector<2x128xf32>
    %58 = vector.shape_cast %57 : vector<2x128xf32> to vector<2x1x128xf32>
    %59 = arith.mulf %56, %56 : vector<2x1x128xf32>
    %60 = arith.subf %58, %59 : vector<2x1x128xf32>
    %cst_50 = arith.constant 0.000000e+00 : f32
    %61 = vector.broadcast %cst_50 : f32 to vector<2x1x128xf32>
    %62 = arith.maximumf %60, %61 : vector<2x1x128xf32>
    %63 = vector.broadcast %56 : vector<2x1x128xf32> to vector<2x8x128xf32>
    %64 = arith.subf %48, %63 : vector<2x8x128xf32>
    %cst_51 = arith.constant 9.99999974E-6 : f32
    %65 = vector.broadcast %cst_51 : f32 to vector<2x1x128xf32>
    %66 = arith.addf %62, %65 : vector<2x1x128xf32>
    %67 = math.rsqrt %66 : vector<2x1x128xf32>
    %68 = vector.broadcast %67 : vector<2x1x128xf32> to vector<2x8x128xf32>
    %69 = arith.mulf %64, %68 : vector<2x8x128xf32>
    %70 = arith.addf %69, %3 : vector<2x8x128xf32>
    %c1_52 = arith.constant 1 : index
    %c0_53 = arith.constant 0 : index
    %c0_54 = arith.constant 0 : index
    %71 = vector.load %arg2[%c1_52, %c0_53, %c0_54] : memref<2x384x128xbf16, #tpu.memory_space<vmem>>, vector<1x384x128xbf16>
    %72 = vector.shape_cast %71 : vector<1x384x128xbf16> to vector<384x128xbf16>
    %c1_55 = arith.constant 1 : index
    %c0_56 = arith.constant 0 : index
    %c0_57 = arith.constant 0 : index
    %73 = vector.load %arg3[%c1_55, %c0_56, %c0_57] : memref<2x384x128xbf16, #tpu.memory_space<vmem>>, vector<1x384x128xbf16>
    %74 = vector.shape_cast %73 : vector<1x384x128xbf16> to vector<384x128xbf16>
    %c0_58 = arith.constant 0 : index
    %c1_59 = arith.constant 1 : index
    %c0_60 = arith.constant 0 : index
    %75 = vector.load %arg6[%c0_58, %c1_59, %c0_60] : memref<2x10x128xf32, #tpu.memory_space<vmem>>, vector<2x8x128xf32>
    tpu.vector_store %arg6[%c0_58, %c1_59, %c0_60], %70 {strides = array<i32>} : memref<2x10x128xf32, #tpu.memory_space<vmem>>, vector<2x8x128xf32>,
    %c0_61 = arith.constant 0 : index
    %c0_62 = arith.constant 0 : index
    %c0_63 = arith.constant 0 : index
    %76 = vector.load %arg6[%c0_61, %c0_62, %c0_63] : memref<2x10x128xf32, #tpu.memory_space<vmem>>, vector<2x8x128xf32>
    %c0_64 = arith.constant 0 : index
    %c1_65 = arith.constant 1 : index
    %c0_66 = arith.constant 0 : index
    %77 = vector.load %arg6[%c0_64, %c1_65, %c0_66] : memref<2x10x128xf32, #tpu.memory_space<vmem>>, vector<2x8x128xf32>
    %c0_67 = arith.constant 0 : index
    %c2_68 = arith.constant 2 : index
    %c0_69 = arith.constant 0 : index
    %78 = vector.load %arg6[%c0_67, %c2_68, %c0_69] : memref<2x10x128xf32, #tpu.memory_space<vmem>>, vector<2x8x128xf32>
    %79 = tpu.concatenate %76, %77, %78 in 2 : vector<2x8x128xf32>, vector<2x8x128xf32>, vector<2x8x128xf32> -> vector<2x8x384xf32>
    %80 = vector.shape_cast %79 : vector<2x8x384xf32> to vector<16x384xf32>
    %81 = arith.truncf %80 : vector<16x384xf32> to vector<16x384xbf16>
    %cst_70 = arith.constant dense<0.000000e+00> : vector<16x128xf32>
    %82 = tpu.matmul %81, %72, %cst_70 {dimension_numbers = #tpu.dot_dimension_numbers<[1], [0], [0], [1], [0, 0, 1, 1], [], []>} : vector<16x384xbf16>, vector<384x128xbf16>, vector<16x128xf32> -> vector<16x128xf32>
    %83 = vector.shape_cast %82 : vector<16x128xf32> to vector<2x8x128xf32>
    %cst_71 = arith.constant dense<0.000000e+00> : vector<2x128xf32>
    %84 = vector.multi_reduction <add>, %83, %cst_71 [1] : vector<2x8x128xf32> to vector<2x128xf32>
    %85 = arith.mulf %83, %83 : vector<2x8x128xf32>
    %cst_72 = arith.constant dense<0.000000e+00> : vector<2x128xf32>
    %86 = vector.multi_reduction <add>, %85, %cst_72 [1] : vector<2x8x128xf32> to vector<2x128xf32>
    %87 = tpu.concatenate %84, %86 in 1 : vector<2x128xf32>, vector<2x128xf32> -> vector<2x256xf32>
    %c0_73 = arith.constant 0 : index
    %c0_74 = arith.constant 0 : index
    %88 = vector.load %arg4[%c0_73, %c0_74] : memref<256x256xf32, #tpu.memory_space<vmem>>, vector<256x256xf32>
    %cst_75 = arith.constant dense<0.000000e+00> : vector<2x256xf32>
    %89 = tpu.matmul %87, %88, %cst_75 {dimension_numbers = #tpu.dot_dimension_numbers<[1], [0], [0], [1], [0, 0, 1, 1], [], []>} : vector<2x256xf32>, vector<256x256xf32>, vector<2x256xf32> -> vector<2x256xf32>
    %90 = vector.extract_strided_slice %89 {offsets = [0, 0], sizes = [2, 128], strides = [1, 1]} : vector<2x256xf32> to vector<2x128xf32>
    %91 = vector.shape_cast %90 : vector<2x128xf32> to vector<2x1x128xf32>
    %92 = vector.extract_strided_slice %89 {offsets = [0, 128], sizes = [2, 128], strides = [1, 1]} : vector<2x256xf32> to vector<2x128xf32>
    %93 = vector.shape_cast %92 : vector<2x128xf32> to vector<2x1x128xf32>
    %94 = arith.mulf %91, %91 : vector<2x1x128xf32>
    %95 = arith.subf %93, %94 : vector<2x1x128xf32>
    %cst_76 = arith.constant 0.000000e+00 : f32
    %96 = vector.broadcast %cst_76 : f32 to vector<2x1x128xf32>
    %97 = arith.maximumf %95, %96 : vector<2x1x128xf32>
    %98 = vector.broadcast %91 : vector<2x1x128xf32> to vector<2x8x128xf32>
    %99 = arith.subf %83, %98 : vector<2x8x128xf32>
    %cst_77 = arith.constant 9.99999974E-6 : f32
    %100 = vector.broadcast %cst_77 : f32 to vector<2x1x128xf32>
    %101 = arith.addf %97, %100 : vector<2x1x128xf32>
    %102 = math.rsqrt %101 : vector<2x1x128xf32>
    %103 = vector.broadcast %102 : vector<2x1x128xf32> to vector<2x8x128xf32>
    %104 = arith.mulf %99, %103 : vector<2x8x128xf32>
    %cst_78 = arith.constant 0.000000e+00 : f32
    %105 = vector.broadcast %cst_78 : f32 to vector<2x8x128xf32>
    %106 = arith.maximumf %104, %105 : vector<2x8x128xf32>
    %c0_79 = arith.constant 0 : index
    %c1_80 = arith.constant 1 : index
    %c0_81 = arith.constant 0 : index
    %107 = vector.load %arg6[%c0_79, %c1_80, %c0_81] : memref<2x10x128xf32, #tpu.memory_space<vmem>>, vector<2x8x128xf32>
    tpu.vector_store %arg6[%c0_79, %c1_80, %c0_81], %106 {strides = array<i32>} : memref<2x10x128xf32, #tpu.memory_space<vmem>>, vector<2x8x128xf32>,
    %c0_82 = arith.constant 0 : index
    %c0_83 = arith.constant 0 : index
    %c0_84 = arith.constant 0 : index
    %108 = vector.load %arg6[%c0_82, %c0_83, %c0_84] : memref<2x10x128xf32, #tpu.memory_space<vmem>>, vector<2x8x128xf32>
    %c0_85 = arith.constant 0 : index
    %c1_86 = arith.constant 1 : index
    %c0_87 = arith.constant 0 : index
    %109 = vector.load %arg6[%c0_85, %c1_86, %c0_87] : memref<2x10x128xf32, #tpu.memory_space<vmem>>, vector<2x8x128xf32>
    %c0_88 = arith.constant 0 : index
    %c2_89 = arith.constant 2 : index
    %c0_90 = arith.constant 0 : index
    %110 = vector.load %arg6[%c0_88, %c2_89, %c0_90] : memref<2x10x128xf32, #tpu.memory_space<vmem>>, vector<2x8x128xf32>
    %111 = tpu.concatenate %108, %109, %110 in 2 : vector<2x8x128xf32>, vector<2x8x128xf32>, vector<2x8x128xf32> -> vector<2x8x384xf32>
    %112 = vector.shape_cast %111 : vector<2x8x384xf32> to vector<16x384xf32>
    %113 = arith.truncf %112 : vector<16x384xf32> to vector<16x384xbf16>
    %cst_91 = arith.constant dense<0.000000e+00> : vector<16x128xf32>
    %114 = tpu.matmul %113, %74, %cst_91 {dimension_numbers = #tpu.dot_dimension_numbers<[1], [0], [0], [1], [0, 0, 1, 1], [], []>} : vector<16x384xbf16>, vector<384x128xbf16>, vector<16x128xf32> -> vector<16x128xf32>
    %115 = vector.shape_cast %114 : vector<16x128xf32> to vector<2x8x128xf32>
    %cst_92 = arith.constant dense<0.000000e+00> : vector<2x128xf32>
    %116 = vector.multi_reduction <add>, %115, %cst_92 [1] : vector<2x8x128xf32> to vector<2x128xf32>
    %117 = arith.mulf %115, %115 : vector<2x8x128xf32>
    %cst_93 = arith.constant dense<0.000000e+00> : vector<2x128xf32>
    %118 = vector.multi_reduction <add>, %117, %cst_93 [1] : vector<2x8x128xf32> to vector<2x128xf32>
    %119 = tpu.concatenate %116, %118 in 1 : vector<2x128xf32>, vector<2x128xf32> -> vector<2x256xf32>
    %c0_94 = arith.constant 0 : index
    %c0_95 = arith.constant 0 : index
    %120 = vector.load %arg4[%c0_94, %c0_95] : memref<256x256xf32, #tpu.memory_space<vmem>>, vector<256x256xf32>
    %cst_96 = arith.constant dense<0.000000e+00> : vector<2x256xf32>
    %121 = tpu.matmul %119, %120, %cst_96 {dimension_numbers = #tpu.dot_dimension_numbers<[1], [0], [0], [1], [0, 0, 1, 1], [], []>} : vector<2x256xf32>, vector<256x256xf32>, vector<2x256xf32> -> vector<2x256xf32>
    %122 = vector.extract_strided_slice %121 {offsets = [0, 0], sizes = [2, 128], strides = [1, 1]} : vector<2x256xf32> to vector<2x128xf32>
    %123 = vector.shape_cast %122 : vector<2x128xf32> to vector<2x1x128xf32>
    %124 = vector.extract_strided_slice %121 {offsets = [0, 128], sizes = [2, 128], strides = [1, 1]} : vector<2x256xf32> to vector<2x128xf32>
    %125 = vector.shape_cast %124 : vector<2x128xf32> to vector<2x1x128xf32>
    %126 = arith.mulf %123, %123 : vector<2x1x128xf32>
    %127 = arith.subf %125, %126 : vector<2x1x128xf32>
    %cst_97 = arith.constant 0.000000e+00 : f32
    %128 = vector.broadcast %cst_97 : f32 to vector<2x1x128xf32>
    %129 = arith.maximumf %127, %128 : vector<2x1x128xf32>
    %130 = vector.broadcast %123 : vector<2x1x128xf32> to vector<2x8x128xf32>
    %131 = arith.subf %115, %130 : vector<2x8x128xf32>
    %cst_98 = arith.constant 9.99999974E-6 : f32
    %132 = vector.broadcast %cst_98 : f32 to vector<2x1x128xf32>
    %133 = arith.addf %129, %132 : vector<2x1x128xf32>
    %134 = math.rsqrt %133 : vector<2x1x128xf32>
    %135 = vector.broadcast %134 : vector<2x1x128xf32> to vector<2x8x128xf32>
    %136 = arith.mulf %131, %135 : vector<2x8x128xf32>
    %137 = arith.addf %136, %70 : vector<2x8x128xf32>
    %c0_99 = arith.constant 0 : index
    %c0_100 = arith.constant 0 : index
    %c0_101 = arith.constant 0 : index
    %138 = vector.load %arg5[%c0_99, %c0_100, %c0_101] : memref<2x8x128xf32, #tpu.memory_space<vmem>>, vector<2x8x128xf32>
    tpu.vector_store %arg5[%c0_99, %c0_100, %c0_101], %137 {strides = array<i32>} : memref<2x8x128xf32, #tpu.memory_space<vmem>>, vector<2x8x128xf32>,
    return
  }
  func.func @transform_0(%arg0: i32) -> (i32, i32, i32) {
    %c0_i32 = arith.constant 0 : i32
    %c0_i32_0 = arith.constant 0 : i32
    %c0_i32_1 = arith.constant 0 : i32
    return %arg0, %c0_i32, %c0_i32_0 : i32, i32, i32
  }
  func.func @transform_1(%arg0: i32) -> (i32, i32, i32) {
    %c0_i32 = arith.constant 0 : i32
    %c0_i32_0 = arith.constant 0 : i32
    %c0_i32_1 = arith.constant 0 : i32
    %c0_i32_2 = arith.constant 0 : i32
    return %c0_i32, %c0_i32_0, %c0_i32_1 : i32, i32, i32
  }
  func.func @transform_2(%arg0: i32) -> (i32, i32, i32) {
    %c0_i32 = arith.constant 0 : i32
    %c0_i32_0 = arith.constant 0 : i32
    %c0_i32_1 = arith.constant 0 : i32
    %c0_i32_2 = arith.constant 0 : i32
    return %c0_i32, %c0_i32_0, %c0_i32_1 : i32, i32, i32
  }
  func.func @transform_3(%arg0: i32) -> (i32, i32) {
    %c0_i32 = arith.constant 0 : i32
    %c0_i32_0 = arith.constant 0 : i32
    %c0_i32_1 = arith.constant 0 : i32
    return %c0_i32, %c0_i32_0 : i32, i32
  }
  func.func @transform_4(%arg0: i32) -> (i32, i32, i32) {
    %c0_i32 = arith.constant 0 : i32
    %c0_i32_0 = arith.constant 0 : i32
    %c0_i32_1 = arith.constant 0 : i32
    return %arg0, %c0_i32, %c0_i32_0 : i32, i32, i32
  }
}

</mosaic_0001>

<llo_original>
// kernel: _resblocks_call.1
$region0: #{_resblocks_call.1}
  #allocation0 [shape = 'u32[]', space=smem, size = 0x4, offset = 0x4, fixed_abs, tag = 'smem constant byte address 0x4 - core index']
  #allocation1 [shape = 'u32[144,128]{1,0:T(1,128)}', space=vmem, size = 0x12000, scoped, tag = 'internal scratch']
  #allocation2 [shape = 'f32[2,10,128]{2,1,0:T(8,128)}', space=vmem, size = 0x4000, scoped, tag = 'scratch operand']
  %s0 = inlined_call_operand.vmem [shape: f32[2,8,128], index: 0, kind: input, shape index: {}]
  %s1 = inlined_call_operand.vmem [shape: bf16[2,384,128], index: 1, kind: input, shape index: {}]
  %s2 = inlined_call_operand.hbm [shape: bf16[2,384,128], index: 2, kind: input, shape index: {}]
  %s3 = inlined_call_operand.vmem [shape: f32[256,256], index: 3, kind: input, shape index: {}]
  %s4 = inlined_call_operand.vmem [shape: f32[2,8,128], index: 4, kind: output, shape index: {}]
  %s5 = sld [smem:[#allocation0]]
  $region30: #{_resblocks_call.1} parent=0
    _
  %s7 = ssub.s32 1, %s5
  %s8 = scalar_select 0, %s7, %s5
  $region1: #{_resblocks_call.1} parent=0
    #allocation3 [shape = 'u8[196608]{0}', space=vmem, size = 0x30000, scoped, tag = 'input window, operand 2, single buffered']
    #allocation4 [shape = 's32[1]{0}', space=sflag, size = 0x4, scoped, tag = 'scoped memory for _resblocks_call.1']
    %9 = vsyncpa [#allocation4], 0
    // Predicated region
    $region2: #{_resblocks_call.1} parent=1 // pred_check
      _
    $region3: #{_resblocks_call.1} parent=1 // pred_check_branch
      %11 = sbr.rel (0) target = $region5
    $region4: #{_resblocks_call.1} parent=1 // pred_region
      _
    $region5: #{_resblocks_call.1} parent=1 // pred_fallthru
      _
    // Predicated region
    $region6: #{_resblocks_call.1} parent=1 // pred_check
      _
    $region7: #{_resblocks_call.1} parent=1 // pred_check_branch
      %13 = sbr.rel (0) target = $region9
    $region8: #{_resblocks_call.1} parent=1 // pred_region
      _
    $region9: #{_resblocks_call.1} parent=1 // pred_fallthru
      _
    // Predicated region
    $region10: #{_resblocks_call.1} parent=1 // pred_check
      _
    $region11: #{_resblocks_call.1} parent=1 // pred_check_branch
      %15 = sbr.rel (0) target = $region13
    $region12: #{_resblocks_call.1} parent=1 // pred_region
      %s17 = ssub.s32 6144, 6144
      %18 = vsyncadd [#allocation4], %s17
      %s19 = sshll.u32 [#allocation3], 4
      %s20 = int_to_ptr.vmem [resolvable:$true] %s19
      %25 = dma.hbm_to_vmem [thread:$0]  %s2, 6144, %s20, [#allocation4], 64, 64, 4
    $region13: #{_resblocks_call.1} parent=1 // pred_fallthru
      _
    // Predicated region
    $region14: #{_resblocks_call.1} parent=1 // pred_check
      _
    $region15: #{_resblocks_call.1} parent=1 // pred_check_branch
      %27 = sbr.rel (0) target = $region17
    $region16: #{_resblocks_call.1} parent=1 // pred_region
      _
    $region17: #{_resblocks_call.1} parent=1 // pred_fallthru
      _
    // Predicated region
    $region18: #{_resblocks_call.1} parent=1 // pred_check
      _
    $region19: #{_resblocks_call.1} parent=1 // pred_check_branch
      %29 = sbr.rel (0) target = $region21
    $region20: #{_resblocks_call.1} parent=1 // pred_region
      %30 = dma.done [#allocation4], 6144
    $region21: #{_resblocks_call.1} parent=1 // pred_fallthru
      _
    %32 = vst [vmem:[#allocation2] sm:$0x1] 0.0
    %33 = vst [vmem:[#allocation2 + $0x10] sm:$0x1] 0.0
    %34 = vst [vmem:[#allocation2 + $0x9] sm:$0x1] 0.0
    %35 = vst [vmem:[#allocation2 + $0x19] sm:$0x1] 0.0
    %v36 = vld [vmem:[%s0] sm:$0xff]
    %v37 = vld [vmem:[%s0 + $0x8] sm:$0xff]
    %v38 = vld [vmem:[%s1] sm:$0xf]
    %v39 = vld [vmem:[%s1 + $0x4] sm:$0xf]
    %v40 = vld [vmem:[%s1 + $0x8] sm:$0xf]
    %v41 = vld [vmem:[%s1 + $0xc] sm:$0xf]
    %v42 = vld [vmem:[%s1 + $0x10] sm:$0xf]
    %v43 = vld [vmem:[%s1 + $0x14] sm:$0xf]
    %v44 = vld [vmem:[%s1 + $0x18] sm:$0xf]
    %v45 = vld [vmem:[%s1 + $0x1c] sm:$0xf]
    %v46 = vld [vmem:[%s1 + $0x20] sm:$0xf]
    %v47 = vld [vmem:[%s1 + $0x24] sm:$0xf]
    %v48 = vld [vmem:[%s1 + $0x28] sm:$0xf]
    %v49 = vld [vmem:[%s1 + $0x2c] sm:$0xf]
    %v50 = vld [vmem:[%s1 + $0x30] sm:$0xf]
    %v51 = vld [vmem:[%s1 + $0x34] sm:$0xf]
    %v52 = vld [vmem:[%s1 + $0x38] sm:$0xf]
    %v53 = vld [vmem:[%s1 + $0x3c] sm:$0xf]
    %v54 = vld [vmem:[%s1 + $0x40] sm:$0xf]
    %v55 = vld [vmem:[%s1 + $0x44] sm:$0xf]
    %v56 = vld [vmem:[%s1 + $0x48] sm:$0xf]
    %v57 = vld [vmem:[%s1 + $0x4c] sm:$0xf]
    %v58 = vld [vmem:[%s1 + $0x50] sm:$0xf]
    %v59 = vld [vmem:[%s1 + $0x54] sm:$0xf]
    %v60 = vld [vmem:[%s1 + $0x58] sm:$0xf]
    %v61 = vld [vmem:[%s1 + $0x5c] sm:$0xf]
    %v62 = vld [vmem:[%s1 + $0x60] sm:$0xf]
    %v63 = vld [vmem:[%s1 + $0x64] sm:$0xf]
    %v64 = vld [vmem:[%s1 + $0x68] sm:$0xf]
    %v65 = vld [vmem:[%s1 + $0x6c] sm:$0xf]
    %v66 = vld [vmem:[%s1 + $0x70] sm:$0xf]
    %v67 = vld [vmem:[%s1 + $0x74] sm:$0xf]
    %v68 = vld [vmem:[%s1 + $0x78] sm:$0xf]
    %v69 = vld [vmem:[%s1 + $0x7c] sm:$0xf]
    %v70 = vld [vmem:[%s1 + $0x80] sm:$0xf]
    %v71 = vld [vmem:[%s1 + $0x84] sm:$0xf]
    %v72 = vld [vmem:[%s1 + $0x88] sm:$0xf]
    %v73 = vld [vmem:[%s1 + $0x8c] sm:$0xf]
    %v74 = vld [vmem:[%s1 + $0x90] sm:$0xf]
    %v75 = vld [vmem:[%s1 + $0x94] sm:$0xf]
    %v76 = vld [vmem:[%s1 + $0x98] sm:$0xf]
    %v77 = vld [vmem:[%s1 + $0x9c] sm:$0xf]
    %v78 = vld [vmem:[%s1 + $0xa0] sm:$0xf]
    %v79 = vld [vmem:[%s1 + $0xa4] sm:$0xf]
    %v80 = vld [vmem:[%s1 + $0xa8] sm:$0xf]
    %v81 = vld [vmem:[%s1 + $0xac] sm:$0xf]
    %v82 = vld [vmem:[%s1 + $0xb0] sm:$0xf]
    %v83 = vld [vmem:[%s1 + $0xb4] sm:$0xf]
    %v84 = vld [vmem:[%s1 + $0xb8] sm:$0xf]
    %v85 = vld [vmem:[%s1 + $0xbc] sm:$0xf]
    %v86 = vld [vmem:[#allocation3] sm:$0xf]
    %v87 = vld [vmem:[#allocation3 + $0x4] sm:$0xf]
    %v88 = vld [vmem:[#allocation3 + $0x8] sm:$0xf]
    %v89 = vld [vmem:[#allocation3 + $0xc] sm:$0xf]
    %v90 = vld [vmem:[#allocation3 + $0x10] sm:$0xf]
    %v91 = vld [vmem:[#allocation3 + $0x14] sm:$0xf]
    %v92 = vld [vmem:[#allocation3 + $0x18] sm:$0xf]
    %v93 = vld [vmem:[#allocation3 + $0x1c] sm:$0xf]
    %v94 = vld [vmem:[#allocation3 + $0x20] sm:$0xf]
    %v95 = vld [vmem:[#allocation3 + $0x24] sm:$0xf]
    %v96 = vld [vmem:[#allocation3 + $0x28] sm:$0xf]
    %v97 = vld [vmem:[#allocation3 + $0x2c] sm:$0xf]
    %v98 = vld [vmem:[#allocation3 + $0x30] sm:$0xf]
    %v99 = vld [vmem:[#allocation3 + $0x34] sm:$0xf]
    %v100 = vld [vmem:[#allocation3 + $0x38] sm:$0xf]
    %v101 = vld [vmem:[#allocation3 + $0x3c] sm:$0xf]
    %v102 = vld [vmem:[#allocation3 + $0x40] sm:$0xf]
    %v103 = vld [vmem:[#allocation3 + $0x44] sm:$0xf]
    %v104 = vld [vmem:[#allocation3 + $0x48] sm:$0xf]
    %v105 = vld [vmem:[#allocation3 + $0x4c] sm:$0xf]
    %v106 = vld [vmem:[#allocation3 + $0x50] sm:$0xf]
    %v107 = vld [vmem:[#allocation3 + $0x54] sm:$0xf]
    %v108 = vld [vmem:[#allocation3 + $0x58] sm:$0xf]
    %v109 = vld [vmem:[#allocation3 + $0x5c] sm:$0xf]
    %v110 = vld [vmem:[#allocation3 + $0x60] sm:$0xf]
    %v111 = vld [vmem:[#allocation3 + $0x64] sm:$0xf]
    %v112 = vld [vmem:[#allocation3 + $0x68] sm:$0xf]
    %v113 = vld [vmem:[#allocation3 + $0x6c] sm:$0xf]
    %v114 = vld [vmem:[#allocation3 + $0x70] sm:$0xf]
    %v115 = vld [vmem:[#allocation3 + $0x74] sm:$0xf]
    %v116 = vld [vmem:[#allocation3 + $0x78] sm:$0xf]
    %v117 = vld [vmem:[#allocation3 + $0x7c] sm:$0xf]
    %v118 = vld [vmem:[#allocation3 + $0x80] sm:$0xf]
    %v119 = vld [vmem:[#allocation3 + $0x84] sm:$0xf]
    %v120 = vld [vmem:[#allocation3 + $0x88] sm:$0xf]
    %v121 = vld [vmem:[#allocation3 + $0x8c] sm:$0xf]
    %v122 = vld [vmem:[#allocation3 + $0x90] sm:$0xf]
    %v123 = vld [vmem:[#allocation3 + $0x94] sm:$0xf]
    %v124 = vld [vmem:[#allocation3 + $0x98] sm:$0xf]
    %v125 = vld [vmem:[#allocation3 + $0x9c] sm:$0xf]
    %v126 = vld [vmem:[#allocation3 + $0xa0] sm:$0xf]
    %v127 = vld [vmem:[#allocation3 + $0xa4] sm:$0xf]
    %v128 = vld [vmem:[#allocation3 + $0xa8] sm:$0xf]
    %v129 = vld [vmem:[#allocation3 + $0xac] sm:$0xf]
    %v130 = vld [vmem:[#allocation3 + $0xb0] sm:$0xf]
    %v131 = vld [vmem:[#allocation3 + $0xb4] sm:$0xf]
    %v132 = vld [vmem:[#allocation3 + $0xb8] sm:$0xf]
    %v133 = vld [vmem:[#allocation3 + $0xbc] sm:$0xf]
    %134 = vst [vmem:[#allocation2 + $0x1] sm:$0xff] %v36
    %135 = vst [vmem:[#allocation2 + $0x11] sm:$0xff] %v37
    %v136 = vld [vmem:[#allocation2] sm:$0xff]
    %v137 = vld [vmem:[#allocation2 + $0x10] sm:$0xff]
    %v138 = vld [vmem:[#allocation2 + $0x1] sm:$0xff]
    %v139 = vld [vmem:[#allocation2 + $0x11] sm:$0xff]
    %v140 = vld [vmem:[#allocation2 + $0x2] sm:$0xff]
    %v141 = vld [vmem:[#allocation2 + $0x12] sm:$0xff]
    %v142 = vpack.c.bf16 %v137, %v136
    %v143 = vpack.c.bf16 %v139, %v138
    %v144 = vpack.c.bf16 %v141, %v140
    %v193 = vunpack.c.l.b16 %v38
    %v194 = vunpack.c.l.b16 %v39
    %v195 = vunpack.c.l.b16 %v40
    %v196 = vunpack.c.l.b16 %v41
    %v197 = vunpack.c.l.b16 %v42
    %v198 = vunpack.c.l.b16 %v43
    %v199 = vunpack.c.l.b16 %v44
    %v200 = vunpack.c.l.b16 %v45
    %v201 = vunpack.c.l.b16 %v46
    %v202 = vunpack.c.l.b16 %v47
    %v203 = vunpack.c.l.b16 %v48
    %v204 = vunpack.c.l.b16 %v49
    %v205 = vunpack.c.l.b16 %v50
    %v206 = vunpack.c.l.b16 %v51
    %v207 = vunpack.c.l.b16 %v52
    %v208 = vunpack.c.l.b16 %v53
    %v209 = vunpack.c.l.b16 %v54
    %v210 = vunpack.c.l.b16 %v55
    %v211 = vunpack.c.l.b16 %v56
    %v212 = vunpack.c.l.b16 %v57
    %v213 = vunpack.c.l.b16 %v58
    %v214 = vunpack.c.l.b16 %v59
    %v215 = vunpack.c.l.b16 %v60
    %v216 = vunpack.c.l.b16 %v61
    %v217 = vunpack.c.l.b16 %v62
    %v218 = vunpack.c.l.b16 %v63
    %v219 = vunpack.c.l.b16 %v64
    %v220 = vunpack.c.l.b16 %v65
    %v221 = vunpack.c.l.b16 %v66
    %v222 = vunpack.c.l.b16 %v67
    %v223 = vunpack.c.l.b16 %v68
    %v224 = vunpack.c.l.b16 %v69
    %v225 = vunpack.c.l.b16 %v70
    %v226 = vunpack.c.l.b16 %v71
    %v227 = vunpack.c.l.b16 %v72
    %v228 = vunpack.c.l.b16 %v73
    %v229 = vunpack.c.l.b16 %v74
    %v230 = vunpack.c.l.b16 %v75
    %v231 = vunpack.c.l.b16 %v76
    %v232 = vunpack.c.l.b16 %v77
    %v233 = vunpack.c.l.b16 %v78
    %v234 = vunpack.c.l.b16 %v79
    %v235 = vunpack.c.l.b16 %v80
    %v236 = vunpack.c.l.b16 %v81
    %v237 = vunpack.c.l.b16 %v82
    %v238 = vunpack.c.l.b16 %v83
    %v239 = vunpack.c.l.b16 %v84
    %v240 = vunpack.c.l.b16 %v85
    %v241 = vpack.c.b16 %v194, %v193
    %v242 = vpack.c.b16 %v196, %v195
    %v243 = vpack.c.b16 %v198, %v197
    %v244 = vpack.c.b16 %v200, %v199
    %v245 = vpack.c.b16 %v202, %v201
    %v246 = vpack.c.b16 %v204, %v203
    %v247 = vpack.c.b16 %v206, %v205
    %v248 = vpack.c.b16 %v208, %v207
    %v249 = vpack.c.b16 %v210, %v209
    %v250 = vpack.c.b16 %v212, %v211
    %v251 = vpack.c.b16 %v214, %v213
    %v252 = vpack.c.b16 %v216, %v215
    %v253 = vpack.c.b16 %v218, %v217
    %v254 = vpack.c.b16 %v220, %v219
    %v255 = vpack.c.b16 %v222, %v221
    %v256 = vpack.c.b16 %v224, %v223
    %v257 = vpack.c.b16 %v226, %v225
    %v258 = vpack.c.b16 %v228, %v227
    %v259 = vpack.c.b16 %v230, %v229
    %v260 = vpack.c.b16 %v232, %v231
    %v261 = vpack.c.b16 %v234, %v233
    %v262 = vpack.c.b16 %v236, %v235
    %v263 = vpack.c.b16 %v238, %v237
    %v264 = vpack.c.b16 %v240, %v239
    %289 = vmatprep.subr.bf16.mxu0 0
    %290 = vmatpush1.bf16.msra.mxu0 %v241
    %291 = vmatprep.subr.bf16.mxu0 0
    %292 = vmatpush1.bf16.msra.mxu0 %v242
    %293 = vmatprep.subr.bf16.mxu0 0
    %294 = vmatpush1.bf16.msra.mxu0 %v243
    %295 = vmatprep.subr.bf16.mxu0 0
    %296 = vmatpush1.bf16.msra.mxu0 %v244
    %297 = vmatprep.subr.bf16.mxu0 0
    %298 = vmatpush1.bf16.msra.mxu0 %v245
    %299 = vmatprep.subr.bf16.mxu0 0
    %300 = vmatpush1.bf16.msra.mxu0 %v246
    %301 = vmatprep.subr.bf16.mxu0 0
    %302 = vmatpush1.bf16.msra.mxu0 %v247
    %303 = vmatprep.subr.bf16.mxu0 0
    %304 = vmatpush1.bf16.msra.mxu0 %v248
    %305 = vmatprep.subr.bf16.mxu0 0
    %306 = vmatpush1.bf16.msra.mxu0 %v249
    %307 = vmatprep.subr.bf16.mxu0 0
    %308 = vmatpush1.bf16.msra.mxu0 %v250
    %309 = vmatprep.subr.bf16.mxu0 0
    %310 = vmatpush1.bf16.msra.mxu0 %v251
    %311 = vmatprep.subr.bf16.mxu0 0
    %312 = vmatpush1.bf16.msra.mxu0 %v252
    %313 = vmatprep.subr.bf16.mxu0 0
    %314 = vmatpush1.bf16.msra.mxu0 %v253
    %315 = vmatprep.subr.bf16.mxu0 0
    %316 = vmatpush1.bf16.msra.mxu0 %v254
    %317 = vmatprep.subr.bf16.mxu0 0
    %318 = vmatpush1.bf16.msra.mxu0 %v255
    %319 = vmatprep.subr.bf16.mxu0 0
    %320 = vmatpush1.bf16.msra.mxu0 %v256
    %321 = vmatprep.mubr.bf16.mxu0 %v143
    %322 = vmatmul.mubr.bf16.gmra.mrb[0].mxu0 %v142
    %v323 = vpop.f32.mrb[0].mxu0
    %v324 = vadd.f32 0.0, %v323
    %v325 = vpop.f32.mrb[0].mxu0
    %v326 = vpop.f32.mrb[0].mxu0
    %v327 = vadd.f32 0.0, %v326
    %v328 = vpop.f32.mrb[0].mxu0
    %329 = vdwg.mxu0
    %330 = vmatprep.subr.bf16.mxu0 0
    %331 = vmatpush1.bf16.msra.mxu0 %v257
    %332 = vmatprep.subr.bf16.mxu0 0
    %333 = vmatpush1.bf16.msra.mxu0 %v258
    %334 = vmatprep.subr.bf16.mxu0 0
    %335 = vmatpush1.bf16.msra.mxu0 %v259
    %336 = vmatprep.subr.bf16.mxu0 0
    %337 = vmatpush1.bf16.msra.mxu0 %v260
    %338 = vmatprep.subr.bf16.mxu0 0
    %339 = vmatpush1.bf16.msra.mxu0 %v261
    %340 = vmatprep.subr.bf16.mxu0 0
    %341 = vmatpush1.bf16.msra.mxu0 %v262
    %342 = vmatprep.subr.bf16.mxu0 0
    %343 = vmatpush1.bf16.msra.mxu0 %v263
    %344 = vmatprep.subr.bf16.mxu0 0
    %345 = vmatpush1.bf16.msra.mxu0 %v264
    %346 = vmatprep.subr.bf16.mxu0 0
    %347 = vmatpush1.bf16.msra.mxu0 0
    %348 = vmatprep.subr.bf16.mxu0 0
    %349 = vmatpush1.bf16.msra.mxu0 0
    %350 = vmatprep.subr.bf16.mxu0 0
    %351 = vmatpush1.bf16.msra.mxu0 0
    %352 = vmatprep.subr.bf16.mxu0 0
    %353 = vmatpush1.bf16.msra.mxu0 0
    %354 = vmatprep.subr.bf16.mxu0 0
    %355 = vmatpush1.bf16.msra.mxu0 0
    %356 = vmatprep.subr.bf16.mxu0 0
    %357 = vmatpush1.bf16.msra.mxu0 0
    %358 = vmatprep.subr.bf16.mxu0 0
    %359 = vmatpush1.bf16.msra.mxu0 0
    %360 = vmatprep.subr.bf16.mxu0 0
    %361 = vmatpush1.bf16.msra.mxu0 0
    %362 = vmatprep.mubr.bf16.mxu0 0
    %363 = vmatmul.mubr.bf16.gmra.mrb[0].mxu0 %v144
    %v364 = vpop.f32.mrb[0].mxu0
    %v365 = vadd.f32 %v324, %v364
    %v366 = vpop.f32.mrb[0].mxu0
    %v367 = vpop.f32.mrb[0].mxu0
    %v368 = vadd.f32 %v327, %v367
    %v369 = vpop.f32.mrb[0].mxu0
    %370 = vdwg.mxu0
    %v371 = vrot.slane %v365, 4
    %v372 = vadd.f32 %v365, %v371
    %v373 = vrot.slane %v372, 2
    %v374 = vadd.f32 %v372, %v373
    %v375 = vrot.slane %v374, 1
    %v376 = vadd.f32 %v374, %v375
    %v377 = vrot.slane %v368, 4
    %v378 = vadd.f32 %v368, %v377
    %v379 = vrot.slane %v378, 2
    %v380 = vadd.f32 %v378, %v379
    %v381 = vrot.slane %v380, 1
    %v382 = vadd.f32 %v380, %v381
    %v383 = vmul.f32 %v365, %v365
    %v384 = vmul.f32 %v368, %v368
    %v385 = vrot.slane %v383, 4
    %v386 = vadd.f32 %v383, %v385
    %v387 = vrot.slane %v386, 2
    %v388 = vadd.f32 %v386, %v387
    %v389 = vrot.slane %v388, 1
    %v390 = vadd.f32 %v388, %v389
    %v391 = vrot.slane %v384, 4
    %v392 = vadd.f32 %v384, %v391
    %v393 = vrot.slane %v392, 2
    %v394 = vadd.f32 %v392, %v393
    %v395 = vrot.slane %v394, 1
    %v396 = vadd.f32 %v394, %v395
    %vm399 = vcmask 1041409
    %v400 = vsel %vm399, %v382, %v376
    %v404 = vsel %vm399, %v396, %v390
    %v406 = vld [vmem:[%s3] sm:$0xff]
    %v407 = vld [vmem:[%s3 + $0x8] sm:$0xff]
    %v408 = vld [vmem:[%s3 + $0x10] sm:$0xff]
    %v409 = vld [vmem:[%s3 + $0x18] sm:$0xff]
    %v410 = vld [vmem:[%s3 + $0x20] sm:$0xff]
    %v411 = vld [vmem:[%s3 + $0x28] sm:$0xff]
    %v412 = vld [vmem:[%s3 + $0x30] sm:$0xff]
    %v413 = vld [vmem:[%s3 + $0x38] sm:$0xff]
    %v414 = vld [vmem:[%s3 + $0x40] sm:$0xff]
    %v415 = vld [vmem:[%s3 + $0x48] sm:$0xff]
    %v416 = vld [vmem:[%s3 + $0x50] sm:$0xff]
    %v417 = vld [vmem:[%s3 + $0x58] sm:$0xff]
    %v418 = vld [vmem:[%s3 + $0x60] sm:$0xff]
    %v419 = vld [vmem:[%s3 + $0x68] sm:$0xff]
    %v420 = vld [vmem:[%s3 + $0x70] sm:$0xff]
    %v421 = vld [vmem:[%s3 + $0x78] sm:$0xff]
    %v422 = vld [vmem:[%s3 + $0x80] sm:$0xff]
    %v423 = vld [vmem:[%s3 + $0x88] sm:$0xff]
    %v424 = vld [vmem:[%s3 + $0x90] sm:$0xff]
    %v425 = vld [vmem:[%s3 + $0x98] sm:$0xff]
    %v426 = vld [vmem:[%s3 + $0xa0] sm:$0xff]
    %v427 = vld [vmem:[%s3 + $0xa8] sm:$0xff]
    %v428 = vld [vmem:[%s3 + $0xb0] sm:$0xff]
    %v429 = vld [vmem:[%s3 + $0xb8] sm:$0xff]
    %v430 = vld [vmem:[%s3 + $0xc0] sm:$0xff]
    %v431 = vld [vmem:[%s3 + $0xc8] sm:$0xff]
    %v432 = vld [vmem:[%s3 + $0xd0] sm:$0xff]
    %v433 = vld [vmem:[%s3 + $0xd8] sm:$0xff]
    %v434 = vld [vmem:[%s3 + $0xe0] sm:$0xff]
    %v435 = vld [vmem:[%s3 + $0xe8] sm:$0xff]
    %v436 = vld [vmem:[%s3 + $0xf0] sm:$0xff]
    %v437 = vld [vmem:[%s3 + $0xf8] sm:$0xff]
    %v438 = vld [vmem:[%s3 + $0x100] sm:$0xff]
    %v439 = vld [vmem:[%s3 + $0x108] sm:$0xff]
    %v440 = vld [vmem:[%s3 + $0x110] sm:$0xff]
    %v441 = vld [vmem:[%s3 + $0x118] sm:$0xff]
    %v442 = vld [vmem:[%s3 + $0x120] sm:$0xff]
    %v443 = vld [vmem:[%s3 + $0x128] sm:$0xff]
    %v444 = vld [vmem:[%s3 + $0x130] sm:$0xff]
    %v445 = vld [vmem:[%s3 + $0x138] sm:$0xff]
    %v446 = vld [vmem:[%s3 + $0x140] sm:$0xff]
    %v447 = vld [vmem:[%s3 + $0x148] sm:$0xff]
    %v448 = vld [vmem:[%s3 + $0x150] sm:$0xff]
    %v449 = vld [vmem:[%s3 + $0x158] sm:$0xff]
    %v450 = vld [vmem:[%s3 + $0x160] sm:$0xff]
    %v451 = vld [vmem:[%s3 + $0x168] sm:$0xff]
    %v452 = vld [vmem:[%s3 + $0x170] sm:$0xff]
    %v453 = vld [vmem:[%s3 + $0x178] sm:$0xff]
    %v454 = vld [vmem:[%s3 + $0x180] sm:$0xff]
    %v455 = vld [vmem:[%s3 + $0x188] sm:$0xff]
    %v456 = vld [vmem:[%s3 + $0x190] sm:$0xff]
    %v457 = vld [vmem:[%s3 + $0x198] sm:$0xff]
    %v458 = vld [vmem:[%s3 + $0x1a0] sm:$0xff]
    %v459 = vld [vmem:[%s3 + $0x1a8] sm:$0xff]
    %v460 = vld [vmem:[%s3 + $0x1b0] sm:$0xff]
    %v461 = vld [vmem:[%s3 + $0x1b8] sm:$0xff]
    %v462 = vld [vmem:[%s3 + $0x1c0] sm:$0xff]
    %v463 = vld [vmem:[%s3 + $0x1c8] sm:$0xff]
    %v464 = vld [vmem:[%s3 + $0x1d0] sm:$0xff]
    %v465 = vld [vmem:[%s3 + $0x1d8] sm:$0xff]
    %v466 = vld [vmem:[%s3 + $0x1e0] sm:$0xff]
    %v467 = vld [vmem:[%s3 + $0x1e8] sm:$0xff]
    %v468 = vld [vmem:[%s3 + $0x1f0] sm:$0xff]
    %v469 = vld [vmem:[%s3 + $0x1f8] sm:$0xff]
    %470 = vmatprep.subr.mxu0 %v407
    %471 = vmatpush1.msra.mxu0 %v406
    %472 = vmatprep.subr.mxu0 %v409
    %473 = vmatpush1.msra.mxu0 %v408
    %474 = vmatprep.subr.mxu0 %v411
    %475 = vmatpush1.msra.mxu0 %v410
    %476 = vmatprep.subr.mxu0 %v413
    %477 = vmatpush1.msra.mxu0 %v412
    %478 = vmatprep.subr.mxu0 %v415
    %479 = vmatpush1.msra.mxu0 %v414
    %480 = vmatprep.subr.mxu0 %v417
    %481 = vmatpush1.msra.mxu0 %v416
    %482 = vmatprep.subr.mxu0 %v419
    %483 = vmatpush1.msra.mxu0 %v418
    %484 = vmatprep.subr.mxu0 %v421
    %485 = vmatpush1.msra.mxu0 %v420
    %486 = vmatprep.subr.mxu0 %v423
    %487 = vmatpush1.msra.mxu0 %v422
    %488 = vmatprep.subr.mxu0 %v425
    %489 = vmatpush1.msra.mxu0 %v424
    %490 = vmatprep.subr.mxu0 %v427
    %491 = vmatpush1.msra.mxu0 %v426
    %492 = vmatprep.subr.mxu0 %v429
    %493 = vmatpush1.msra.mxu0 %v428
    %494 = vmatprep.subr.mxu0 %v431
    %495 = vmatpush1.msra.mxu0 %v430
    %496 = vmatprep.subr.mxu0 %v433
    %497 = vmatpush1.msra.mxu0 %v432
    %498 = vmatprep.subr.mxu0 %v435
    %499 = vmatpush1.msra.mxu0 %v434
    %500 = vmatprep.subr.mxu0 %v437
    %501 = vmatpush1.msra.mxu0 %v436
    %502 = vmatprep.subr.mxu0 %v439
    %503 = vmatpush1.msra.mxu0 %v438
    %504 = vmatprep.subr.mxu0 %v441
    %505 = vmatpush1.msra.mxu0 %v440
    %506 = vmatprep.subr.mxu0 %v443
    %507 = vmatpush1.msra.mxu0 %v442
    %508 = vmatprep.subr.mxu0 %v445
    %509 = vmatpush1.msra.mxu0 %v444
    %510 = vmatprep.subr.mxu0 %v447
    %511 = vmatpush1.msra.mxu0 %v446
    %512 = vmatprep.subr.mxu0 %v449
    %513 = vmatpush1.msra.mxu0 %v448
    %514 = vmatprep.subr.mxu0 %v451
    %515 = vmatpush1.msra.mxu0 %v450
    %516 = vmatprep.subr.mxu0 %v453
    %517 = vmatpush1.msra.mxu0 %v452
    %518 = vmatprep.subr.mxu0 %v455
    %519 = vmatpush1.msra.mxu0 %v454
    %520 = vmatprep.subr.mxu0 %v457
    %521 = vmatpush1.msra.mxu0 %v456
    %522 = vmatprep.subr.mxu0 %v459
    %523 = vmatpush1.msra.mxu0 %v458
    %524 = vmatprep.subr.mxu0 %v461
    %525 = vmatpush1.msra.mxu0 %v460
    %526 = vmatprep.subr.mxu0 %v463
    %527 = vmatpush1.msra.mxu0 %v462
    %528 = vmatprep.subr.mxu0 %v465
    %529 = vmatpush1.msra.mxu0 %v464
    %530 = vmatprep.subr.mxu0 %v467
    %531 = vmatpush1.msra.mxu0 %v466
    %532 = vmatprep.subr.mxu0 %v469
    %533 = vmatpush1.msra.mxu0 %v468
    %534 = vmatprep.mubr.f32.mxu0 %v404
    %535 = vmatmul.mubr.f32.gmra.mrb[0].mxu0 %v400
    %v536 = vpop.f32.mrb[0].mxu0
    %v537 = vadd.f32 0.0, %v536
    %v538 = vpop.f32.mrb[0].mxu0
    %v539 = vadd.f32 0.0, %v538
    %540 = vdwg.mxu0
    %v543 = vunpack.c.l.s4 1966171168
    %v544 = vunpack.c.0.s8 %v543
    %v545 = vlaneseq
    %v546 = vshrl.u32 %v545, 7
    %v547 = vsub.s32 %v544, %v546
    %v548 = vrot.slane %v537, %v547
    %v549 = vcombine.high %v548, %v548
    %v551 = vunpack.c.l.s4 1966171168
    %v552 = vunpack.c.0.s8 %v551
    %v553 = vlaneseq
    %v554 = vshrl.u32 %v553, 7
    %v555 = vsub.s32 %v552, %v554
    %v556 = vrot.slane %v548, %v555
    %v558 = vunpack.c.l.s4 1966171168
    %v559 = vunpack.c.0.s8 %v558
    %v560 = vlaneseq
    %v561 = vshrl.u32 %v560, 7
    %v562 = vsub.s32 %v559, %v561
    %v563 = vrot.slane %v549, %v562
    %v568 = vunpack.c.l.s4 1966171168
    %v569 = vunpack.c.0.s8 %v568
    %v570 = vlaneseq
    %v571 = vshrl.u32 %v570, 7
    %v572 = vsub.s32 %v569, %v571
    %v573 = vrot.slane %v539, %v572
    %v574 = vcombine.high %v573, %v573
    %v576 = vunpack.c.l.s4 1966171168
    %v577 = vunpack.c.0.s8 %v576
    %v578 = vlaneseq
    %v579 = vshrl.u32 %v578, 7
    %v580 = vsub.s32 %v577, %v579
    %v581 = vrot.slane %v573, %v580
    %v583 = vunpack.c.l.s4 1966171168
    %v584 = vunpack.c.0.s8 %v583
    %v585 = vlaneseq
    %v586 = vshrl.u32 %v585, 7
    %v587 = vsub.s32 %v584, %v586
    %v588 = vrot.slane %v574, %v587
    %v591 = vmul.f32 %v556, %v556
    %v592 = vmul.f32 %v563, %v563
    %v593 = vsub.f32 %v581, %v591
    %v594 = vsub.f32 %v588, %v592
    %v595 = vmax.f32 %v593, 0.0
    %v596 = vmax.f32 %v594, 0.0
    %v597 = vlaneseq
    %v598 = vshrl.u32 %v597, 7
    %v599 = vsub.s32 0, %v598
    %v600 = vrot.slane %v556, %v599
    %v601 = vlaneseq
    %v602 = vshrl.u32 %v601, 7
    %v603 = vsub.s32 0, %v602
    %v604 = vrot.slane %v563, %v603
    %v607 = vsub.f32 %v365, %v600
    %v608 = vsub.f32 %v368, %v604
    %v609 = vadd.f32 %v595, 1e-05
    %v610 = vadd.f32 %v596, 1e-05
    %v611 = vrsqrt.pop %v609
    %v612 = vrsqrt.pop %v610
    %v615 = vlaneseq
    %v616 = vshrl.u32 %v615, 7
    %v617 = vsub.s32 0, %v616
    %v618 = vrot.slane %v611, %v617
    %v619 = vlaneseq
    %v620 = vshrl.u32 %v619, 7
    %v621 = vsub.s32 0, %v620
    %v622 = vrot.slane %v612, %v621
    %v625 = vmul.f32 %v607, %v618
    %v626 = vmul.f32 %v608, %v622
    %v627 = vmax.f32 %v625, 0.0
    %v628 = vmax.f32 %v626, 0.0
    %629 = vst [vmem:[#allocation2 + $0x1] sm:$0xff] %v627
    %630 = vst [vmem:[#allocation2 + $0x11] sm:$0xff] %v628
    %v631 = vld [vmem:[#allocation2] sm:$0xff]
    %v632 = vld [vmem:[#allocation2 + $0x10] sm:$0xff]
    %v633 = vld [vmem:[#allocation2 + $0x1] sm:$0xff]
    %v634 = vld [vmem:[#allocation2 + $0x11] sm:$0xff]
    %v635 = vld [vmem:[#allocation2 + $0x2] sm:$0xff]
    %v636 = vld [vmem:[#allocation2 + $0x12] sm:$0xff]
    %v637 = vpack.c.bf16 %v632, %v631
    %v638 = vpack.c.bf16 %v634, %v633
    %v639 = vpack.c.bf16 %v636, %v635
    %v688 = vunpack.c.l.b16 %v86
    %v689 = vunpack.c.l.b16 %v87
    %v690 = vunpack.c.l.b16 %v88
    %v691 = vunpack.c.l.b16 %v89
    %v692 = vunpack.c.l.b16 %v90
    %v693 = vunpack.c.l.b16 %v91
    %v694 = vunpack.c.l.b16 %v92
    %v695 = vunpack.c.l.b16 %v93
    %v696 = vunpack.c.l.b16 %v94
    %v697 = vunpack.c.l.b16 %v95
    %v698 = vunpack.c.l.b16 %v96
    %v699 = vunpack.c.l.b16 %v97
    %v700 = vunpack.c.l.b16 %v98
    %v701 = vunpack.c.l.b16 %v99
    %v702 = vunpack.c.l.b16 %v100
    %v703 = vunpack.c.l.b16 %v101
    %v704 = vunpack.c.l.b16 %v102
    %v705 = vunpack.c.l.b16 %v103
    %v706 = vunpack.c.l.b16 %v104
    %v707 = vunpack.c.l.b16 %v105
    %v708 = vunpack.c.l.b16 %v106
    %v709 = vunpack.c.l.b16 %v107
    %v710 = vunpack.c.l.b16 %v108
    %v711 = vunpack.c.l.b16 %v109
    %v712 = vunpack.c.l.b16 %v110
    %v713 = vunpack.c.l.b16 %v111
    %v714 = vunpack.c.l.b16 %v112
    %v715 = vunpack.c.l.b16 %v113
    %v716 = vunpack.c.l.b16 %v114
    %v717 = vunpack.c.l.b16 %v115
    %v718 = vunpack.c.l.b16 %v116
    %v719 = vunpack.c.l.b16 %v117
    %v720 = vunpack.c.l.b16 %v118
    %v721 = vunpack.c.l.b16 %v119
    %v722 = vunpack.c.l.b16 %v120
    %v723 = vunpack.c.l.b16 %v121
    %v724 = vunpack.c.l.b16 %v122
    %v725 = vunpack.c.l.b16 %v123
    %v726 = vunpack.c.l.b16 %v124
    %v727 = vunpack.c.l.b16 %v125
    %v728 = vunpack.c.l.b16 %v126
    %v729 = vunpack.c.l.b16 %v127
    %v730 = vunpack.c.l.b16 %v128
    %v731 = vunpack.c.l.b16 %v129
    %v732 = vunpack.c.l.b16 %v130
    %v733 = vunpack.c.l.b16 %v131
    %v734 = vunpack.c.l.b16 %v132
    %v735 = vunpack.c.l.b16 %v133
    %v736 = vpack.c.b16 %v689, %v688
    %v737 = vpack.c.b16 %v691, %v690
    %v738 = vpack.c.b16 %v693, %v692
    %v739 = vpack.c.b16 %v695, %v694
    %v740 = vpack.c.b16 %v697, %v696
    %v741 = vpack.c.b16 %v699, %v698
    %v742 = vpack.c.b16 %v701, %v700
    %v743 = vpack.c.b16 %v703, %v702
    %v744 = vpack.c.b16 %v705, %v704
    %v745 = vpack.c.b16 %v707, %v706
    %v746 = vpack.c.b16 %v709, %v708
    %v747 = vpack.c.b16 %v711, %v710
    %v748 = vpack.c.b16 %v713, %v712
    %v749 = vpack.c.b16 %v715, %v714
    %v750 = vpack.c.b16 %v717, %v716
    %v751 = vpack.c.b16 %v719, %v718
    %v752 = vpack.c.b16 %v721, %v720
    %v753 = vpack.c.b16 %v723, %v722
    %v754 = vpack.c.b16 %v725, %v724
    %v755 = vpack.c.b16 %v727, %v726
    %v756 = vpack.c.b16 %v729, %v728
    %v757 = vpack.c.b16 %v731, %v730
    %v758 = vpack.c.b16 %v733, %v732
    %v759 = vpack.c.b16 %v735, %v734
    %784 = vmatprep.subr.bf16.mxu0 0
    %785 = vmatpush1.bf16.msra.mxu0 %v736
    %786 = vmatprep.subr.bf16.mxu0 0
    %787 = vmatpush1.bf16.msra.mxu0 %v737
    %788 = vmatprep.subr.bf16.mxu0 0
    %789 = vmatpush1.bf16.msra.mxu0 %v738
    %790 = vmatprep.subr.bf16.mxu0 0
    %791 = vmatpush1.bf16.msra.mxu0 %v739
    %792 = vmatprep.subr.bf16.mxu0 0
    %793 = vmatpush1.bf16.msra.mxu0 %v740
    %794 = vmatprep.subr.bf16.mxu0 0
    %795 = vmatpush1.bf16.msra.mxu0 %v741
    %796 = vmatprep.subr.bf16.mxu0 0
    %797 = vmatpush1.bf16.msra.mxu0 %v742
    %798 = vmatprep.subr.bf16.mxu0 0
    %799 = vmatpush1.bf16.msra.mxu0 %v743
    %800 = vmatprep.subr.bf16.mxu0 0
    %801 = vmatpush1.bf16.msra.mxu0 %v744
    %802 = vmatprep.subr.bf16.mxu0 0
    %803 = vmatpush1.bf16.msra.mxu0 %v745
    %804 = vmatprep.subr.bf16.mxu0 0
    %805 = vmatpush1.bf16.msra.mxu0 %v746
    %806 = vmatprep.subr.bf16.mxu0 0
    %807 = vmatpush1.bf16.msra.mxu0 %v747
    %808 = vmatprep.subr.bf16.mxu0 0
    %809 = vmatpush1.bf16.msra.mxu0 %v748
    %810 = vmatprep.subr.bf16.mxu0 0
    %811 = vmatpush1.bf16.msra.mxu0 %v749
    %812 = vmatprep.subr.bf16.mxu0 0
    %813 = vmatpush1.bf16.msra.mxu0 %v750
    %814 = vmatprep.subr.bf16.mxu0 0
    %815 = vmatpush1.bf16.msra.mxu0 %v751
    %816 = vmatprep.mubr.bf16.mxu0 %v638
    %817 = vmatmul.mubr.bf16.gmra.mrb[0].mxu0 %v637
    %v818 = vpop.f32.mrb[0].mxu0
    %v819 = vadd.f32 0.0, %v818
    %v820 = vpop.f32.mrb[0].mxu0
    %v821 = vpop.f32.mrb[0].mxu0
    %v822 = vadd.f32 0.0, %v821
    %v823 = vpop.f32.mrb[0].mxu0
    %824 = vdwg.mxu0
    %825 = vmatprep.subr.bf16.mxu0 0
    %826 = vmatpush1.bf16.msra.mxu0 %v752
    %827 = vmatprep.subr.bf16.mxu0 0
    %828 = vmatpush1.bf16.msra.mxu0 %v753
    %829 = vmatprep.subr.bf16.mxu0 0
    %830 = vmatpush1.bf16.msra.mxu0 %v754
    %831 = vmatprep.subr.bf16.mxu0 0
    %832 = vmatpush1.bf16.msra.mxu0 %v755
    %833 = vmatprep.subr.bf16.mxu0 0
    %834 = vmatpush1.bf16.msra.mxu0 %v756
    %835 = vmatprep.subr.bf16.mxu0 0
    %836 = vmatpush1.bf16.msra.mxu0 %v757
    %837 = vmatprep.subr.bf16.mxu0 0
    %838 = vmatpush1.bf16.msra.mxu0 %v758
    %839 = vmatprep.subr.bf16.mxu0 0
    %840 = vmatpush1.bf16.msra.mxu0 %v759
    %841 = vmatprep.subr.bf16.mxu0 0
    %842 = vmatpush1.bf16.msra.mxu0 0
    %843 = vmatprep.subr.bf16.mxu0 0
    %844 = vmatpush1.bf16.msra.mxu0 0
    %845 = vmatprep.subr.bf16.mxu0 0
    %846 = vmatpush1.bf16.msra.mxu0 0
    %847 = vmatprep.subr.bf16.mxu0 0
    %848 = vmatpush1.bf16.msra.mxu0 0
    %849 = vmatprep.subr.bf16.mxu0 0
    %850 = vmatpush1.bf16.msra.mxu0 0
    %851 = vmatprep.subr.bf16.mxu0 0
    %852 = vmatpush1.bf16.msra.mxu0 0
    %853 = vmatprep.subr.bf16.mxu0 0
    %854 = vmatpush1.bf16.msra.mxu0 0
    %855 = vmatprep.subr.bf16.mxu0 0
    %856 = vmatpush1.bf16.msra.mxu0 0
    %857 = vmatprep.mubr.bf16.mxu0 0
    %858 = vmatmul.mubr.bf16.gmra.mrb[0].mxu0 %v639
    %v859 = vpop.f32.mrb[0].mxu0
    %v860 = vadd.f32 %v819, %v859
    %v861 = vpop.f32.mrb[0].mxu0
    %v862 = vpop.f32.mrb[0].mxu0
    %v863 = vadd.f32 %v822, %v862
    %v864 = vpop.f32.mrb[0].mxu0
    %865 = vdwg.mxu0
    %v866 = vrot.slane %v860, 4
    %v867 = vadd.f32 %v860, %v866
    %v868 = vrot.slane %v867, 2
    %v869 = vadd.f32 %v867, %v868
    %v870 = vrot.slane %v869, 1
    %v871 = vadd.f32 %v869, %v870
    %v872 = vrot.slane %v863, 4
    %v873 = vadd.f32 %v863, %v872
    %v874 = vrot.slane %v873, 2
    %v875 = vadd.f32 %v873, %v874
    %v876 = vrot.slane %v875, 1
    %v877 = vadd.f32 %v875, %v876
    %v878 = vmul.f32 %v860, %v860
    %v879 = vmul.f32 %v863, %v863
    %v880 = vrot.slane %v878, 4
    %v881 = vadd.f32 %v878, %v880
    %v882 = vrot.slane %v881, 2
    %v883 = vadd.f32 %v881, %v882
    %v884 = vrot.slane %v883, 1
    %v885 = vadd.f32 %v883, %v884
    %v886 = vrot.slane %v879, 4
    %v887 = vadd.f32 %v879, %v886
    %v888 = vrot.slane %v887, 2
    %v889 = vadd.f32 %v887, %v888
    %v890 = vrot.slane %v889, 1
    %v891 = vadd.f32 %v889, %v890
    %v894 = vsel %vm399, %v877, %v871
    %v898 = vsel %vm399, %v891, %v885
    %v900 = vld [vmem:[%s3] sm:$0xff]
    %v901 = vld [vmem:[%s3 + $0x8] sm:$0xff]
    %v902 = vld [vmem:[%s3 + $0x10] sm:$0xff]
    %v903 = vld [vmem:[%s3 + $0x18] sm:$0xff]
    %v904 = vld [vmem:[%s3 + $0x20] sm:$0xff]
    %v905 = vld [vmem:[%s3 + $0x28] sm:$0xff]
    %v906 = vld [vmem:[%s3 + $0x30] sm:$0xff]
    %v907 = vld [vmem:[%s3 + $0x38] sm:$0xff]
    %v908 = vld [vmem:[%s3 + $0x40] sm:$0xff]
    %v909 = vld [vmem:[%s3 + $0x48] sm:$0xff]
    %v910 = vld [vmem:[%s3 + $0x50] sm:$0xff]
    %v911 = vld [vmem:[%s3 + $0x58] sm:$0xff]
    %v912 = vld [vmem:[%s3 + $0x60] sm:$0xff]
    %v913 = vld [vmem:[%s3 + $0x68] sm:$0xff]
    %v914 = vld [vmem:[%s3 + $0x70] sm:$0xff]
    %v915 = vld [vmem:[%s3 + $0x78] sm:$0xff]
    %v916 = vld [vmem:[%s3 + $0x80] sm:$0xff]
    %v917 = vld [vmem:[%s3 + $0x88] sm:$0xff]
    %v918 = vld [vmem:[%s3 + $0x90] sm:$0xff]
    %v919 = vld [vmem:[%s3 + $0x98] sm:$0xff]
    %v920 = vld [vmem:[%s3 + $0xa0] sm:$0xff]
    %v921 = vld [vmem:[%s3 + $0xa8] sm:$0xff]
    %v922 = vld [vmem:[%s3 + $0xb0] sm:$0xff]
    %v923 = vld [vmem:[%s3 + $0xb8] sm:$0xff]
    %v924 = vld [vmem:[%s3 + $0xc0] sm:$0xff]
    %v925 = vld [vmem:[%s3 + $0xc8] sm:$0xff]
    %v926 = vld [vmem:[%s3 + $0xd0] sm:$0xff]
    %v927 = vld [vmem:[%s3 + $0xd8] sm:$0xff]
    %v928 = vld [vmem:[%s3 + $0xe0] sm:$0xff]
    %v929 = vld [vmem:[%s3 + $0xe8] sm:$0xff]
    %v930 = vld [vmem:[%s3 + $0xf0] sm:$0xff]
    %v931 = vld [vmem:[%s3 + $0xf8] sm:$0xff]
    %v932 = vld [vmem:[%s3 + $0x100] sm:$0xff]
    %v933 = vld [vmem:[%s3 + $0x108] sm:$0xff]
    %v934 = vld [vmem:[%s3 + $0x110] sm:$0xff]
    %v935 = vld [vmem:[%s3 + $0x118] sm:$0xff]
    %v936 = vld [vmem:[%s3 + $0x120] sm:$0xff]
    %v937 = vld [vmem:[%s3 + $0x128] sm:$0xff]
    %v938 = vld [vmem:[%s3 + $0x130] sm:$0xff]
    %v939 = vld [vmem:[%s3 + $0x138] sm:$0xff]
    %v940 = vld [vmem:[%s3 + $0x140] sm:$0xff]
    %v941 = vld [vmem:[%s3 + $0x148] sm:$0xff]
    %v942 = vld [vmem:[%s3 + $0x150] sm:$0xff]
    %v943 = vld [vmem:[%s3 + $0x158] sm:$0xff]
    %v944 = vld [vmem:[%s3 + $0x160] sm:$0xff]
    %v945 = vld [vmem:[%s3 + $0x168] sm:$0xff]
    %v946 = vld [vmem:[%s3 + $0x170] sm:$0xff]
    %v947 = vld [vmem:[%s3 + $0x178] sm:$0xff]
    %v948 = vld [vmem:[%s3 + $0x180] sm:$0xff]
    %v949 = vld [vmem:[%s3 + $0x188] sm:$0xff]
    %v950 = vld [vmem:[%s3 + $0x190] sm:$0xff]
    %v951 = vld [vmem:[%s3 + $0x198] sm:$0xff]
    %v952 = vld [vmem:[%s3 + $0x1a0] sm:$0xff]
    %v953 = vld [vmem:[%s3 + $0x1a8] sm:$0xff]
    %v954 = vld [vmem:[%s3 + $0x1b0] sm:$0xff]
    %v955 = vld [vmem:[%s3 + $0x1b8] sm:$0xff]
    %v956 = vld [vmem:[%s3 + $0x1c0] sm:$0xff]
    %v957 = vld [vmem:[%s3 + $0x1c8] sm:$0xff]
    %v958 = vld [vmem:[%s3 + $0x1d0] sm:$0xff]
    %v959 = vld [vmem:[%s3 + $0x1d8] sm:$0xff]
    %v960 = vld [vmem:[%s3 + $0x1e0] sm:$0xff]
    %v961 = vld [vmem:[%s3 + $0x1e8] sm:$0xff]
    %v962 = vld [vmem:[%s3 + $0x1f0] sm:$0xff]
    %v963 = vld [vmem:[%s3 + $0x1f8] sm:$0xff]
    %964 = vmatprep.subr.mxu0 %v901
    %965 = vmatpush1.msra.mxu0 %v900
    %966 = vmatprep.subr.mxu0 %v903
    %967 = vmatpush1.msra.mxu0 %v902
    %968 = vmatprep.subr.mxu0 %v905
    %969 = vmatpush1.msra.mxu0 %v904
    %970 = vmatprep.subr.mxu0 %v907
    %971 = vmatpush1.msra.mxu0 %v906
    %972 = vmatprep.subr.mxu0 %v909
    %973 = vmatpush1.msra.mxu0 %v908
    %974 = vmatprep.subr.mxu0 %v911
    %975 = vmatpush1.msra.mxu0 %v910
    %976 = vmatprep.subr.mxu0 %v913
    %977 = vmatpush1.msra.mxu0 %v912
    %978 = vmatprep.subr.mxu0 %v915
    %979 = vmatpush1.msra.mxu0 %v914
    %980 = vmatprep.subr.mxu0 %v917
    %981 = vmatpush1.msra.mxu0 %v916
    %982 = vmatprep.subr.mxu0 %v919
    %983 = vmatpush1.msra.mxu0 %v918
    %984 = vmatprep.subr.mxu0 %v921
    %985 = vmatpush1.msra.mxu0 %v920
    %986 = vmatprep.subr.mxu0 %v923
    %987 = vmatpush1.msra.mxu0 %v922
    %988 = vmatprep.subr.mxu0 %v925
    %989 = vmatpush1.msra.mxu0 %v924
    %990 = vmatprep.subr.mxu0 %v927
    %991 = vmatpush1.msra.mxu0 %v926
    %992 = vmatprep.subr.mxu0 %v929
    %993 = vmatpush1.msra.mxu0 %v928
    %994 = vmatprep.subr.mxu0 %v931
    %995 = vmatpush1.msra.mxu0 %v930
    %996 = vmatprep.subr.mxu0 %v933
    %997 = vmatpush1.msra.mxu0 %v932
    %998 = vmatprep.subr.mxu0 %v935
    %999 = vmatpush1.msra.mxu0 %v934
    %1000 = vmatprep.subr.mxu0 %v937
    %1001 = vmatpush1.msra.mxu0 %v936
    %1002 = vmatprep.subr.mxu0 %v939
    %1003 = vmatpush1.msra.mxu0 %v938
    %1004 = vmatprep.subr.mxu0 %v941
    %1005 = vmatpush1.msra.mxu0 %v940
    %1006 = vmatprep.subr.mxu0 %v943
    %1007 = vmatpush1.msra.mxu0 %v942
    %1008 = vmatprep.subr.mxu0 %v945
    %1009 = vmatpush1.msra.mxu0 %v944
    %1010 = vmatprep.subr.mxu0 %v947
    %1011 = vmatpush1.msra.mxu0 %v946
    %1012 = vmatprep.subr.mxu0 %v949
    %1013 = vmatpush1.msra.mxu0 %v948
    %1014 = vmatprep.subr.mxu0 %v951
    %1015 = vmatpush1.msra.mxu0 %v950
    %1016 = vmatprep.subr.mxu0 %v953
    %1017 = vmatpush1.msra.mxu0 %v952
    %1018 = vmatprep.subr.mxu0 %v955
    %1019 = vmatpush1.msra.mxu0 %v954
    %1020 = vmatprep.subr.mxu0 %v957
    %1021 = vmatpush1.msra.mxu0 %v956
    %1022 = vmatprep.subr.mxu0 %v959
    %1023 = vmatpush1.msra.mxu0 %v958
    %1024 = vmatprep.subr.mxu0 %v961
    %1025 = vmatpush1.msra.mxu0 %v960
    %1026 = vmatprep.subr.mxu0 %v963
    %1027 = vmatpush1.msra.mxu0 %v962
    %1028 = vmatprep.mubr.f32.mxu0 %v898
    %1029 = vmatmul.mubr.f32.gmra.mrb[0].mxu0 %v894
    %v1030 = vpop.f32.mrb[0].mxu0
    %v1031 = vadd.f32 0.0, %v1030
    %v1032 = vpop.f32.mrb[0].mxu0
    %v1033 = vadd.f32 0.0, %v1032
    %1034 = vdwg.mxu0
    %v1037 = vunpack.c.l.s4 1966171168
    %v1038 = vunpack.c.0.s8 %v1037
    %v1039 = vlaneseq
    %v1040 = vshrl.u32 %v1039, 7
    %v1041 = vsub.s32 %v1038, %v1040
    %v1042 = vrot.slane %v1031, %v1041
    %v1043 = vcombine.high %v1042, %v1042
    %v1045 = vunpack.c.l.s4 1966171168
    %v1046 = vunpack.c.0.s8 %v1045
    %v1047 = vlaneseq
    %v1048 = vshrl.u32 %v1047, 7
    %v1049 = vsub.s32 %v1046, %v1048
    %v1050 = vrot.slane %v1042, %v1049
    %v1052 = vunpack.c.l.s4 1966171168
    %v1053 = vunpack.c.0.s8 %v1052
    %v1054 = vlaneseq
    %v1055 = vshrl.u32 %v1054, 7
    %v1056 = vsub.s32 %v1053, %v1055
    %v1057 = vrot.slane %v1043, %v1056
    %v1062 = vunpack.c.l.s4 1966171168
    %v1063 = vunpack.c.0.s8 %v1062
    %v1064 = vlaneseq
    %v1065 = vshrl.u32 %v1064, 7
    %v1066 = vsub.s32 %v1063, %v1065
    %v1067 = vrot.slane %v1033, %v1066
    %v1068 = vcombine.high %v1067, %v1067
    %v1070 = vunpack.c.l.s4 1966171168
    %v1071 = vunpack.c.0.s8 %v1070
    %v1072 = vlaneseq
    %v1073 = vshrl.u32 %v1072, 7
    %v1074 = vsub.s32 %v1071, %v1073
    %v1075 = vrot.slane %v1067, %v1074
    %v1077 = vunpack.c.l.s4 1966171168
    %v1078 = vunpack.c.0.s8 %v1077
    %v1079 = vlaneseq
    %v1080 = vshrl.u32 %v1079, 7
    %v1081 = vsub.s32 %v1078, %v1080
    %v1082 = vrot.slane %v1068, %v1081
    %v1085 = vmul.f32 %v1050, %v1050
    %v1086 = vmul.f32 %v1057, %v1057
    %v1087 = vsub.f32 %v1075, %v1085
    %v1088 = vsub.f32 %v1082, %v1086
    %v1089 = vmax.f32 %v1087, 0.0
    %v1090 = vmax.f32 %v1088, 0.0
    %v1091 = vlaneseq
    %v1092 = vshrl.u32 %v1091, 7
    %v1093 = vsub.s32 0, %v1092
    %v1094 = vrot.slane %v1050, %v1093
    %v1095 = vlaneseq
    %v1096 = vshrl.u32 %v1095, 7
    %v1097 = vsub.s32 0, %v1096
    %v1098 = vrot.slane %v1057, %v1097
    %v1101 = vsub.f32 %v860, %v1094
    %v1102 = vsub.f32 %v863, %v1098
    %v1103 = vadd.f32 %v1089, 1e-05
    %v1104 = vadd.f32 %v1090, 1e-05
    %v1105 = vrsqrt.pop %v1103
    %v1106 = vrsqrt.pop %v1104
    %v1109 = vlaneseq
    %v1110 = vshrl.u32 %v1109, 7
    %v1111 = vsub.s32 0, %v1110
    %v1112 = vrot.slane %v1105, %v1111
    %v1113 = vlaneseq
    %v1114 = vshrl.u32 %v1113, 7
    %v1115 = vsub.s32 0, %v1114
    %v1116 = vrot.slane %v1106, %v1115
    %v1119 = vmul.f32 %v1101, %v1112
    %v1120 = vmul.f32 %v1102, %v1116
    %v1121 = vadd.f32 %v1119, %v36
    %v1122 = vadd.f32 %v1120, %v37
    %s1123 = scalar_lea.vmem %s1, 192
    %v1124 = vld [vmem:[%s1123] sm:$0xf]
    %v1125 = vld [vmem:[%s1123 + $0x4] sm:$0xf]
    %v1126 = vld [vmem:[%s1123 + $0x8] sm:$0xf]
    %v1127 = vld [vmem:[%s1123 + $0xc] sm:$0xf]
    %v1128 = vld [vmem:[%s1123 + $0x10] sm:$0xf]
    %v1129 = vld [vmem:[%s1123 + $0x14] sm:$0xf]
    %v1130 = vld [vmem:[%s1123 + $0x18] sm:$0xf]
    %v1131 = vld [vmem:[%s1123 + $0x1c] sm:$0xf]
    %v1132 = vld [vmem:[%s1123 + $0x20] sm:$0xf]
    %v1133 = vld [vmem:[%s1123 + $0x24] sm:$0xf]
    %v1134 = vld [vmem:[%s1123 + $0x28] sm:$0xf]
    %v1135 = vld [vmem:[%s1123 + $0x2c] sm:$0xf]
    %v1136 = vld [vmem:[%s1123 + $0x30] sm:$0xf]
    %v1137 = vld [vmem:[%s1123 + $0x34] sm:$0xf]
    %v1138 = vld [vmem:[%s1123 + $0x38] sm:$0xf]
    %v1139 = vld [vmem:[%s1123 + $0x3c] sm:$0xf]
    %v1140 = vld [vmem:[%s1123 + $0x40] sm:$0xf]
    %v1141 = vld [vmem:[%s1123 + $0x44] sm:$0xf]
    %v1142 = vld [vmem:[%s1123 + $0x48] sm:$0xf]
    %v1143 = vld [vmem:[%s1123 + $0x4c] sm:$0xf]
    %v1144 = vld [vmem:[%s1123 + $0x50] sm:$0xf]
    %v1145 = vld [vmem:[%s1123 + $0x54] sm:$0xf]
    %v1146 = vld [vmem:[%s1123 + $0x58] sm:$0xf]
    %v1147 = vld [vmem:[%s1123 + $0x5c] sm:$0xf]
    %v1148 = vld [vmem:[%s1123 + $0x60] sm:$0xf]
    %v1149 = vld [vmem:[%s1123 + $0x64] sm:$0xf]
    %v1150 = vld [vmem:[%s1123 + $0x68] sm:$0xf]
    %v1151 = vld [vmem:[%s1123 + $0x6c] sm:$0xf]
    %v1152 = vld [vmem:[%s1123 + $0x70] sm:$0xf]
    %v1153 = vld [vmem:[%s1123 + $0x74] sm:$0xf]
    %v1154 = vld [vmem:[%s1123 + $0x78] sm:$0xf]
    %v1155 = vld [vmem:[%s1123 + $0x7c] sm:$0xf]
    %v1156 = vld [vmem:[%s1123 + $0x80] sm:$0xf]
    %v1157 = vld [vmem:[%s1123 + $0x84] sm:$0xf]
    %v1158 = vld [vmem:[%s1123 + $0x88] sm:$0xf]
    %v1159 = vld [vmem:[%s1123 + $0x8c] sm:$0xf]
    %v1160 = vld [vmem:[%s1123 + $0x90] sm:$0xf]
    %v1161 = vld [vmem:[%s1123 + $0x94] sm:$0xf]
    %v1162 = vld [vmem:[%s1123 + $0x98] sm:$0xf]
    %v1163 = vld [vmem:[%s1123 + $0x9c] sm:$0xf]
    %v1164 = vld [vmem:[%s1123 + $0xa0] sm:$0xf]
    %v1165 = vld [vmem:[%s1123 + $0xa4] sm:$0xf]
    %v1166 = vld [vmem:[%s1123 + $0xa8] sm:$0xf]
    %v1167 = vld [vmem:[%s1123 + $0xac] sm:$0xf]
    %v1168 = vld [vmem:[%s1123 + $0xb0] sm:$0xf]
    %v1169 = vld [vmem:[%s1123 + $0xb4] sm:$0xf]
    %v1170 = vld [vmem:[%s1123 + $0xb8] sm:$0xf]
    %v1171 = vld [vmem:[%s1123 + $0xbc] sm:$0xf]
    %s1172 = scalar_lea.vmem [#allocation3], 192
    %v1173 = vld [vmem:[%s1172] sm:$0xf]
    %v1174 = vld [vmem:[%s1172 + $0x4] sm:$0xf]
    %v1175 = vld [vmem:[%s1172 + $0x8] sm:$0xf]
    %v1176 = vld [vmem:[%s1172 + $0xc] sm:$0xf]
    %v1177 = vld [vmem:[%s1172 + $0x10] sm:$0xf]
    %v1178 = vld [vmem:[%s1172 + $0x14] sm:$0xf]
    %v1179 = vld [vmem:[%s1172 + $0x18] sm:$0xf]
    %v1180 = vld [vmem:[%s1172 + $0x1c] sm:$0xf]
    %v1181 = vld [vmem:[%s1172 + $0x20] sm:$0xf]
    %v1182 = vld [vmem:[%s1172 + $0x24] sm:$0xf]
    %v1183 = vld [vmem:[%s1172 + $0x28] sm:$0xf]
    %v1184 = vld [vmem:[%s1172 + $0x2c] sm:$0xf]
    %v1185 = vld [vmem:[%s1172 + $0x30] sm:$0xf]
    %v1186 = vld [vmem:[%s1172 + $0x34] sm:$0xf]
    %v1187 = vld [vmem:[%s1172 + $0x38] sm:$0xf]
    %v1188 = vld [vmem:[%s1172 + $0x3c] sm:$0xf]
    %v1189 = vld [vmem:[%s1172 + $0x40] sm:$0xf]
    %v1190 = vld [vmem:[%s1172 + $0x44] sm:$0xf]
    %v1191 = vld [vmem:[%s1172 + $0x48] sm:$0xf]
    %v1192 = vld [vmem:[%s1172 + $0x4c] sm:$0xf]
    %v1193 = vld [vmem:[%s1172 + $0x50] sm:$0xf]
    %v1194 = vld [vmem:[%s1172 + $0x54] sm:$0xf]
    %v1195 = vld [vmem:[%s1172 + $0x58] sm:$0xf]
    %v1196 = vld [vmem:[%s1172 + $0x5c] sm:$0xf]
    %v1197 = vld [vmem:[%s1172 + $0x60] sm:$0xf]
    %v1198 = vld [vmem:[%s1172 + $0x64] sm:$0xf]
    %v1199 = vld [vmem:[%s1172 + $0x68] sm:$0xf]
    %v1200 = vld [vmem:[%s1172 + $0x6c] sm:$0xf]
    %v1201 = vld [vmem:[%s1172 + $0x70] sm:$0xf]
    %v1202 = vld [vmem:[%s1172 + $0x74] sm:$0xf]
    %v1203 = vld [vmem:[%s1172 + $0x78] sm:$0xf]
    %v1204 = vld [vmem:[%s1172 + $0x7c] sm:$0xf]
    %v1205 = vld [vmem:[%s1172 + $0x80] sm:$0xf]
    %v1206 = vld [vmem:[%s1172 + $0x84] sm:$0xf]
    %v1207 = vld [vmem:[%s1172 + $0x88] sm:$0xf]
    %v1208 = vld [vmem:[%s1172 + $0x8c] sm:$0xf]
    %v1209 = vld [vmem:[%s1172 + $0x90] sm:$0xf]
    %v1210 = vld [vmem:[%s1172 + $0x94] sm:$0xf]
    %v1211 = vld [vmem:[%s1172 + $0x98] sm:$0xf]
    %v1212 = vld [vmem:[%s1172 + $0x9c] sm:$0xf]
    %v1213 = vld [vmem:[%s1172 + $0xa0] sm:$0xf]
    %v1214 = vld [vmem:[%s1172 + $0xa4] sm:$0xf]
    %v1215 = vld [vmem:[%s1172 + $0xa8] sm:$0xf]
    %v1216 = vld [vmem:[%s1172 + $0xac] sm:$0xf]
    %v1217 = vld [vmem:[%s1172 + $0xb0] sm:$0xf]
    %v1218 = vld [vmem:[%s1172 + $0xb4] sm:$0xf]
    %v1219 = vld [vmem:[%s1172 + $0xb8] sm:$0xf]
    %v1220 = vld [vmem:[%s1172 + $0xbc] sm:$0xf]
    %1221 = vst [vmem:[#allocation2 + $0x1] sm:$0xff] %v1121
    %1222 = vst [vmem:[#allocation2 + $0x11] sm:$0xff] %v1122
    %v1223 = vld [vmem:[#allocation2] sm:$0xff]
    %v1224 = vld [vmem:[#allocation2 + $0x10] sm:$0xff]
    %v1225 = vld [vmem:[#allocation2 + $0x1] sm:$0xff]
    %v1226 = vld [vmem:[#allocation2 + $0x11] sm:$0xff]
    %v1227 = vld [vmem:[#allocation2 + $0x2] sm:$0xff]
    %v1228 = vld [vmem:[#allocation2 + $0x12] sm:$0xff]
    %v1229 = vpack.c.bf16 %v1224, %v1223
    %v1230 = vpack.c.bf16 %v1226, %v1225
    %v1231 = vpack.c.bf16 %v1228, %v1227
    %v1280 = vunpack.c.l.b16 %v1124
    %v1281 = vunpack.c.l.b16 %v1125
    %v1282 = vunpack.c.l.b16 %v1126
    %v1283 = vunpack.c.l.b16 %v1127
    %v1284 = vunpack.c.l.b16 %v1128
    %v1285 = vunpack.c.l.b16 %v1129
    %v1286 = vunpack.c.l.b16 %v1130
    %v1287 = vunpack.c.l.b16 %v1131
    %v1288 = vunpack.c.l.b16 %v1132
    %v1289 = vunpack.c.l.b16 %v1133
    %v1290 = vunpack.c.l.b16 %v1134
    %v1291 = vunpack.c.l.b16 %v1135
    %v1292 = vunpack.c.l.b16 %v1136
    %v1293 = vunpack.c.l.b16 %v1137
    %v1294 = vunpack.c.l.b16 %v1138
    %v1295 = vunpack.c.l.b16 %v1139
    %v1296 = vunpack.c.l.b16 %v1140
    %v1297 = vunpack.c.l.b16 %v1141
    %v1298 = vunpack.c.l.b16 %v1142
    %v1299 = vunpack.c.l.b16 %v1143
    %v1300 = vunpack.c.l.b16 %v1144
    %v1301 = vunpack.c.l.b16 %v1145
    %v1302 = vunpack.c.l.b16 %v1146
    %v1303 = vunpack.c.l.b16 %v1147
    %v1304 = vunpack.c.l.b16 %v1148
    %v1305 = vunpack.c.l.b16 %v1149
    %v1306 = vunpack.c.l.b16 %v1150
    %v1307 = vunpack.c.l.b16 %v1151
    %v1308 = vunpack.c.l.b16 %v1152
    %v1309 = vunpack.c.l.b16 %v1153
    %v1310 = vunpack.c.l.b16 %v1154
    %v1311 = vunpack.c.l.b16 %v1155
    %v1312 = vunpack.c.l.b16 %v1156
    %v1313 = vunpack.c.l.b16 %v1157
    %v1314 = vunpack.c.l.b16 %v1158
    %v1315 = vunpack.c.l.b16 %v1159
    %v1316 = vunpack.c.l.b16 %v1160
    %v1317 = vunpack.c.l.b16 %v1161
    %v1318 = vunpack.c.l.b16 %v1162
    %v1319 = vunpack.c.l.b16 %v1163
    %v1320 = vunpack.c.l.b16 %v1164
    %v1321 = vunpack.c.l.b16 %v1165
    %v1322 = vunpack.c.l.b16 %v1166
    %v1323 = vunpack.c.l.b16 %v1167
    %v1324 = vunpack.c.l.b16 %v1168
    %v1325 = vunpack.c.l.b16 %v1169
    %v1326 = vunpack.c.l.b16 %v1170
    %v1327 = vunpack.c.l.b16 %v1171
    %v1328 = vpack.c.b16 %v1281, %v1280
    %v1329 = vpack.c.b16 %v1283, %v1282
    %v1330 = vpack.c.b16 %v1285, %v1284
    %v1331 = vpack.c.b16 %v1287, %v1286
    %v1332 = vpack.c.b16 %v1289, %v1288
    %v1333 = vpack.c.b16 %v1291, %v1290
    %v1334 = vpack.c.b16 %v1293, %v1292
    %v1335 = vpack.c.b16 %v1295, %v1294
    %v1336 = vpack.c.b16 %v1297, %v1296
    %v1337 = vpack.c.b16 %v1299, %v1298
    %v1338 = vpack.c.b16 %v1301, %v1300
    %v1339 = vpack.c.b16 %v1303, %v1302
    %v1340 = vpack.c.b16 %v1305, %v1304
    %v1341 = vpack.c.b16 %v1307, %v1306
    %v1342 = vpack.c.b16 %v1309, %v1308
    %v1343 = vpack.c.b16 %v1311, %v1310
    %v1344 = vpack.c.b16 %v1313, %v1312
    %v1345 = vpack.c.b16 %v1315, %v1314
    %v1346 = vpack.c.b16 %v1317, %v1316
    %v1347 = vpack.c.b16 %v1319, %v1318
    %v1348 = vpack.c.b16 %v1321, %v1320
    %v1349 = vpack.c.b16 %v1323, %v1322
    %v1350 = vpack.c.b16 %v1325, %v1324
    %v1351 = vpack.c.b16 %v1327, %v1326
    %1376 = vmatprep.subr.bf16.mxu0 0
    %1377 = vmatpush1.bf16.msra.mxu0 %v1328
    %1378 = vmatprep.subr.bf16.mxu0 0
    %1379 = vmatpush1.bf16.msra.mxu0 %v1329
    %1380 = vmatprep.subr.bf16.mxu0 0
    %1381 = vmatpush1.bf16.msra.mxu0 %v1330
    %1382 = vmatprep.subr.bf16.mxu0 0
    %1383 = vmatpush1.bf16.msra.mxu0 %v1331
    %1384 = vmatprep.subr.bf16.mxu0 0
    %1385 = vmatpush1.bf16.msra.mxu0 %v1332
    %1386 = vmatprep.subr.bf16.mxu0 0
    %1387 = vmatpush1.bf16.msra.mxu0 %v1333
    %1388 = vmatprep.subr.bf16.mxu0 0
    %1389 = vmatpush1.bf16.msra.mxu0 %v1334
    %1390 = vmatprep.subr.bf16.mxu0 0
    %1391 = vmatpush1.bf16.msra.mxu0 %v1335
    %1392 = vmatprep.subr.bf16.mxu0 0
    %1393 = vmatpush1.bf16.msra.mxu0 %v1336
    %1394 = vmatprep.subr.bf16.mxu0 0
    %1395 = vmatpush1.bf16.msra.mxu0 %v1337
    %1396 = vmatprep.subr.bf16.mxu0 0
    %1397 = vmatpush1.bf16.msra.mxu0 %v1338
    %1398 = vmatprep.subr.bf16.mxu0 0
    %1399 = vmatpush1.bf16.msra.mxu0 %v1339
    %1400 = vmatprep.subr.bf16.mxu0 0
    %1401 = vmatpush1.bf16.msra.mxu0 %v1340
    %1402 = vmatprep.subr.bf16.mxu0 0
    %1403 = vmatpush1.bf16.msra.mxu0 %v1341
    %1404 = vmatprep.subr.bf16.mxu0 0
    %1405 = vmatpush1.bf16.msra.mxu0 %v1342
    %1406 = vmatprep.subr.bf16.mxu0 0
    %1407 = vmatpush1.bf16.msra.mxu0 %v1343
    %1408 = vmatprep.mubr.bf16.mxu0 %v1230
    %1409 = vmatmul.mubr.bf16.gmra.mrb[0].mxu0 %v1229
    %v1410 = vpop.f32.mrb[0].mxu0
    %v1411 = vadd.f32 0.0, %v1410
    %v1412 = vpop.f32.mrb[0].mxu0
    %v1413 = vpop.f32.mrb[0].mxu0
    %v1414 = vadd.f32 0.0, %v1413
    %v1415 = vpop.f32.mrb[0].mxu0
    %1416 = vdwg.mxu0
    %1417 = vmatprep.subr.bf16.mxu0 0
    %1418 = vmatpush1.bf16.msra.mxu0 %v1344
    %1419 = vmatprep.subr.bf16.mxu0 0
    %1420 = vmatpush1.bf16.msra.mxu0 %v1345
    %1421 = vmatprep.subr.bf16.mxu0 0
    %1422 = vmatpush1.bf16.msra.mxu0 %v1346
    %1423 = vmatprep.subr.bf16.mxu0 0
    %1424 = vmatpush1.bf16.msra.mxu0 %v1347
    %1425 = vmatprep.subr.bf16.mxu0 0
    %1426 = vmatpush1.bf16.msra.mxu0 %v1348
    %1427 = vmatprep.subr.bf16.mxu0 0
    %1428 = vmatpush1.bf16.msra.mxu0 %v1349
    %1429 = vmatprep.subr.bf16.mxu0 0
    %1430 = vmatpush1.bf16.msra.mxu0 %v1350
    %1431 = vmatprep.subr.bf16.mxu0 0
    %1432 = vmatpush1.bf16.msra.mxu0 %v1351
    %1433 = vmatprep.subr.bf16.mxu0 0
    %1434 = vmatpush1.bf16.msra.mxu0 0
    %1435 = vmatprep.subr.bf16.mxu0 0
    %1436 = vmatpush1.bf16.msra.mxu0 0
    %1437 = vmatprep.subr.bf16.mxu0 0
    %1438 = vmatpush1.bf16.msra.mxu0 0
    %1439 = vmatprep.subr.bf16.mxu0 0
    %1440 = vmatpush1.bf16.msra.mxu0 0
    %1441 = vmatprep.subr.bf16.mxu0 0
    %1442 = vmatpush1.bf16.msra.mxu0 0
    %1443 = vmatprep.subr.bf16.mxu0 0
    %1444 = vmatpush1.bf16.msra.mxu0 0
    %1445 = vmatprep.subr.bf16.mxu0 0
    %1446 = vmatpush1.bf16.msra.mxu0 0
    %1447 = vmatprep.subr.bf16.mxu0 0
    %1448 = vmatpush1.bf16.msra.mxu0 0
    %1449 = vmatprep.mubr.bf16.mxu0 0
    %1450 = vmatmul.mubr.bf16.gmra.mrb[0].mxu0 %v1231
    %v1451 = vpop.f32.mrb[0].mxu0
    %v1452 = vadd.f32 %v1411, %v1451
    %v1453 = vpop.f32.mrb[0].mxu0
    %v1454 = vpop.f32.mrb[0].mxu0
    %v1455 = vadd.f32 %v1414, %v1454
    %v1456 = vpop.f32.mrb[0].mxu0
    %1457 = vdwg.mxu0
    %v1458 = vrot.slane %v1452, 4
    %v1459 = vadd.f32 %v1452, %v1458
    %v1460 = vrot.slane %v1459, 2
    %v1461 = vadd.f32 %v1459, %v1460
    %v1462 = vrot.slane %v1461, 1
    %v1463 = vadd.f32 %v1461, %v1462
    %v1464 = vrot.slane %v1455, 4
    %v1465 = vadd.f32 %v1455, %v1464
    %v1466 = vrot.slane %v1465, 2
    %v1467 = vadd.f32 %v1465, %v1466
    %v1468 = vrot.slane %v1467, 1
    %v1469 = vadd.f32 %v1467, %v1468
    %v1470 = vmul.f32 %v1452, %v1452
    %v1471 = vmul.f32 %v1455, %v1455
    %v1472 = vrot.slane %v1470, 4
    %v1473 = vadd.f32 %v1470, %v1472
    %v1474 = vrot.slane %v1473, 2
    %v1475 = vadd.f32 %v1473, %v1474
    %v1476 = vrot.slane %v1475, 1
    %v1477 = vadd.f32 %v1475, %v1476
    %v1478 = vrot.slane %v1471, 4
    %v1479 = vadd.f32 %v1471, %v1478
    %v1480 = vrot.slane %v1479, 2
    %v1481 = vadd.f32 %v1479, %v1480
    %v1482 = vrot.slane %v1481, 1
    %v1483 = vadd.f32 %v1481, %v1482
    %v1486 = vsel %vm399, %v1469, %v1463
    %v1490 = vsel %vm399, %v1483, %v1477
    %v1492 = vld [vmem:[%s3] sm:$0xff]
    %v1493 = vld [vmem:[%s3 + $0x8] sm:$0xff]
    %v1494 = vld [vmem:[%s3 + $0x10] sm:$0xff]
    %v1495 = vld [vmem:[%s3 + $0x18] sm:$0xff]
    %v1496 = vld [vmem:[%s3 + $0x20] sm:$0xff]
    %v1497 = vld [vmem:[%s3 + $0x28] sm:$0xff]
    %v1498 = vld [vmem:[%s3 + $0x30] sm:$0xff]
    %v1499 = vld [vmem:[%s3 + $0x38] sm:$0xff]
    %v1500 = vld [vmem:[%s3 + $0x40] sm:$0xff]
    %v1501 = vld [vmem:[%s3 + $0x48] sm:$0xff]
    %v1502 = vld [vmem:[%s3 + $0x50] sm:$0xff]
    %v1503 = vld [vmem:[%s3 + $0x58] sm:$0xff]
    %v1504 = vld [vmem:[%s3 + $0x60] sm:$0xff]
    %v1505 = vld [vmem:[%s3 + $0x68] sm:$0xff]
    %v1506 = vld [vmem:[%s3 + $0x70] sm:$0xff]
    %v1507 = vld [vmem:[%s3 + $0x78] sm:$0xff]
    %v1508 = vld [vmem:[%s3 + $0x80] sm:$0xff]
    %v1509 = vld [vmem:[%s3 + $0x88] sm:$0xff]
    %v1510 = vld [vmem:[%s3 + $0x90] sm:$0xff]
    %v1511 = vld [vmem:[%s3 + $0x98] sm:$0xff]
    %v1512 = vld [vmem:[%s3 + $0xa0] sm:$0xff]
    %v1513 = vld [vmem:[%s3 + $0xa8] sm:$0xff]
    %v1514 = vld [vmem:[%s3 + $0xb0] sm:$0xff]
    %v1515 = vld [vmem:[%s3 + $0xb8] sm:$0xff]
    %v1516 = vld [vmem:[%s3 + $0xc0] sm:$0xff]
    %v1517 = vld [vmem:[%s3 + $0xc8] sm:$0xff]
    %v1518 = vld [vmem:[%s3 + $0xd0] sm:$0xff]
    %v1519 = vld [vmem:[%s3 + $0xd8] sm:$0xff]
    %v1520 = vld [vmem:[%s3 + $0xe0] sm:$0xff]
    %v1521 = vld [vmem:[%s3 + $0xe8] sm:$0xff]
    %v1522 = vld [vmem:[%s3 + $0xf0] sm:$0xff]
    %v1523 = vld [vmem:[%s3 + $0xf8] sm:$0xff]
    %v1524 = vld [vmem:[%s3 + $0x100] sm:$0xff]
    %v1525 = vld [vmem:[%s3 + $0x108] sm:$0xff]
    %v1526 = vld [vmem:[%s3 + $0x110] sm:$0xff]
    %v1527 = vld [vmem:[%s3 + $0x118] sm:$0xff]
    %v1528 = vld [vmem:[%s3 + $0x120] sm:$0xff]
    %v1529 = vld [vmem:[%s3 + $0x128] sm:$0xff]
    %v1530 = vld [vmem:[%s3 + $0x130] sm:$0xff]
    %v1531 = vld [vmem:[%s3 + $0x138] sm:$0xff]
    %v1532 = vld [vmem:[%s3 + $0x140] sm:$0xff]
    %v1533 = vld [vmem:[%s3 + $0x148] sm:$0xff]
    %v1534 = vld [vmem:[%s3 + $0x150] sm:$0xff]
    %v1535 = vld [vmem:[%s3 + $0x158] sm:$0xff]
    %v1536 = vld [vmem:[%s3 + $0x160] sm:$0xff]
    %v1537 = vld [vmem:[%s3 + $0x168] sm:$0xff]
    %v1538 = vld [vmem:[%s3 + $0x170] sm:$0xff]
    %v1539 = vld [vmem:[%s3 + $0x178] sm:$0xff]
    %v1540 = vld [vmem:[%s3 + $0x180] sm:$0xff]
    %v1541 = vld [vmem:[%s3 + $0x188] sm:$0xff]
    %v1542 = vld [vmem:[%s3 + $0x190] sm:$0xff]
    %v1543 = vld [vmem:[%s3 + $0x198] sm:$0xff]
    %v1544 = vld [vmem:[%s3 + $0x1a0] sm:$0xff]
    %v1545 = vld [vmem:[%s3 + $0x1a8] sm:$0xff]
    %v1546 = vld [vmem:[%s3 + $0x1b0] sm:$0xff]
    %v1547 = vld [vmem:[%s3 + $0x1b8] sm:$0xff]
    %v1548 = vld [vmem:[%s3 + $0x1c0] sm:$0xff]
    %v1549 = vld [vmem:[%s3 + $0x1c8] sm:$0xff]
    %v1550 = vld [vmem:[%s3 + $0x1d0] sm:$0xff]
    %v1551 = vld [vmem:[%s3 + $0x1d8] sm:$0xff]
    %v1552 = vld [vmem:[%s3 + $0x1e0] sm:$0xff]
    %v1553 = vld [vmem:[%s3 + $0x1e8] sm:$0xff]
    %v1554 = vld [vmem:[%s3 + $0x1f0] sm:$0xff]
    %v1555 = vld [vmem:[%s3 + $0x1f8] sm:$0xff]
    %1556 = vmatprep.subr.mxu0 %v1493
    %1557 = vmatpush1.msra.mxu0 %v1492
    %1558 = vmatprep.subr.mxu0 %v1495
    %1559 = vmatpush1.msra.mxu0 %v1494
    %1560 = vmatprep.subr.mxu0 %v1497
    %1561 = vmatpush1.msra.mxu0 %v1496
    %1562 = vmatprep.subr.mxu0 %v1499
    %1563 = vmatpush1.msra.mxu0 %v1498
    %1564 = vmatprep.subr.mxu0 %v1501
    %1565 = vmatpush1.msra.mxu0 %v1500
    %1566 = vmatprep.subr.mxu0 %v1503
    %1567 = vmatpush1.msra.mxu0 %v1502
    %1568 = vmatprep.subr.mxu0 %v1505
    %1569 = vmatpush1.msra.mxu0 %v1504
    %1570 = vmatprep.subr.mxu0 %v1507
    %1571 = vmatpush1.msra.mxu0 %v1506
    %1572 = vmatprep.subr.mxu0 %v1509
    %1573 = vmatpush1.msra.mxu0 %v1508
    %1574 = vmatprep.subr.mxu0 %v1511
    %1575 = vmatpush1.msra.mxu0 %v1510
    %1576 = vmatprep.subr.mxu0 %v1513
    %1577 = vmatpush1.msra.mxu0 %v1512
    %1578 = vmatprep.subr.mxu0 %v1515
    %1579 = vmatpush1.msra.mxu0 %v1514
    %1580 = vmatprep.subr.mxu0 %v1517
    %1581 = vmatpush1.msra.mxu0 %v1516
    %1582 = vmatprep.subr.mxu0 %v1519
    %1583 = vmatpush1.msra.mxu0 %v1518
    %1584 = vmatprep.subr.mxu0 %v1521
    %1585 = vmatpush1.msra.mxu0 %v1520
    %1586 = vmatprep.subr.mxu0 %v1523
    %1587 = vmatpush1.msra.mxu0 %v1522
    %1588 = vmatprep.subr.mxu0 %v1525
    %1589 = vmatpush1.msra.mxu0 %v1524
    %1590 = vmatprep.subr.mxu0 %v1527
    %1591 = vmatpush1.msra.mxu0 %v1526
    %1592 = vmatprep.subr.mxu0 %v1529
    %1593 = vmatpush1.msra.mxu0 %v1528
    %1594 = vmatprep.subr.mxu0 %v1531
    %1595 = vmatpush1.msra.mxu0 %v1530
    %1596 = vmatprep.subr.mxu0 %v1533
    %1597 = vmatpush1.msra.mxu0 %v1532
    %1598 = vmatprep.subr.mxu0 %v1535
    %1599 = vmatpush1.msra.mxu0 %v1534
    %1600 = vmatprep.subr.mxu0 %v1537
    %1601 = vmatpush1.msra.mxu0 %v1536
    %1602 = vmatprep.subr.mxu0 %v1539
    %1603 = vmatpush1.msra.mxu0 %v1538
    %1604 = vmatprep.subr.mxu0 %v1541
    %1605 = vmatpush1.msra.mxu0 %v1540
    %1606 = vmatprep.subr.mxu0 %v1543
    %1607 = vmatpush1.msra.mxu0 %v1542
    %1608 = vmatprep.subr.mxu0 %v1545
    %1609 = vmatpush1.msra.mxu0 %v1544
    %1610 = vmatprep.subr.mxu0 %v1547
    %1611 = vmatpush1.msra.mxu0 %v1546
    %1612 = vmatprep.subr.mxu0 %v1549
    %1613 = vmatpush1.msra.mxu0 %v1548
    %1614 = vmatprep.subr.mxu0 %v1551
    %1615 = vmatpush1.msra.mxu0 %v1550
    %1616 = vmatprep.subr.mxu0 %v1553
    %1617 = vmatpush1.msra.mxu0 %v1552
    %1618 = vmatprep.subr.mxu0 %v1555
    %1619 = vmatpush1.msra.mxu0 %v1554
    %1620 = vmatprep.mubr.f32.mxu0 %v1490
    %1621 = vmatmul.mubr.f32.gmra.mrb[0].mxu0 %v1486
    %v1622 = vpop.f32.mrb[0].mxu0
    %v1623 = vadd.f32 0.0, %v1622
    %v1624 = vpop.f32.mrb[0].mxu0
    %v1625 = vadd.f32 0.0, %v1624
    %1626 = vdwg.mxu0
    %v1629 = vunpack.c.l.s4 1966171168
    %v1630 = vunpack.c.0.s8 %v1629
    %v1631 = vlaneseq
    %v1632 = vshrl.u32 %v1631, 7
    %v1633 = vsub.s32 %v1630, %v1632
    %v1634 = vrot.slane %v1623, %v1633
    %v1635 = vcombine.high %v1634, %v1634
    %v1637 = vunpack.c.l.s4 1966171168
    %v1638 = vunpack.c.0.s8 %v1637
    %v1639 = vlaneseq
    %v1640 = vshrl.u32 %v1639, 7
    %v1641 = vsub.s32 %v1638, %v1640
    %v1642 = vrot.slane %v1634, %v1641
    %v1644 = vunpack.c.l.s4 1966171168
    %v1645 = vunpack.c.0.s8 %v1644
    %v1646 = vlaneseq
    %v1647 = vshrl.u32 %v1646, 7
    %v1648 = vsub.s32 %v1645, %v1647
    %v1649 = vrot.slane %v1635, %v1648
    %v1654 = vunpack.c.l.s4 1966171168
    %v1655 = vunpack.c.0.s8 %v1654
    %v1656 = vlaneseq
    %v1657 = vshrl.u32 %v1656, 7
    %v1658 = vsub.s32 %v1655, %v1657
    %v1659 = vrot.slane %v1625, %v1658
    %v1660 = vcombine.high %v1659, %v1659
    %v1662 = vunpack.c.l.s4 1966171168
    %v1663 = vunpack.c.0.s8 %v1662
    %v1664 = vlaneseq
    %v1665 = vshrl.u32 %v1664, 7
    %v1666 = vsub.s32 %v1663, %v1665
    %v1667 = vrot.slane %v1659, %v1666
    %v1669 = vunpack.c.l.s4 1966171168
    %v1670 = vunpack.c.0.s8 %v1669
    %v1671 = vlaneseq
    %v1672 = vshrl.u32 %v1671, 7
    %v1673 = vsub.s32 %v1670, %v1672
    %v1674 = vrot.slane %v1660, %v1673
    %v1677 = vmul.f32 %v1642, %v1642
    %v1678 = vmul.f32 %v1649, %v1649
    %v1679 = vsub.f32 %v1667, %v1677
    %v1680 = vsub.f32 %v1674, %v1678
    %v1681 = vmax.f32 %v1679, 0.0
    %v1682 = vmax.f32 %v1680, 0.0
    %v1683 = vlaneseq
    %v1684 = vshrl.u32 %v1683, 7
    %v1685 = vsub.s32 0, %v1684
    %v1686 = vrot.slane %v1642, %v1685
    %v1687 = vlaneseq
    %v1688 = vshrl.u32 %v1687, 7
    %v1689 = vsub.s32 0, %v1688
    %v1690 = vrot.slane %v1649, %v1689
    %v1693 = vsub.f32 %v1452, %v1686
    %v1694 = vsub.f32 %v1455, %v1690
    %v1695 = vadd.f32 %v1681, 1e-05
    %v1696 = vadd.f32 %v1682, 1e-05
    %v1697 = vrsqrt.pop %v1695
    %v1698 = vrsqrt.pop %v1696
    %v1701 = vlaneseq
    %v1702 = vshrl.u32 %v1701, 7
    %v1703 = vsub.s32 0, %v1702
    %v1704 = vrot.slane %v1697, %v1703
    %v1705 = vlaneseq
    %v1706 = vshrl.u32 %v1705, 7
    %v1707 = vsub.s32 0, %v1706
    %v1708 = vrot.slane %v1698, %v1707
    %v1711 = vmul.f32 %v1693, %v1704
    %v1712 = vmul.f32 %v1694, %v1708
    %v1713 = vmax.f32 %v1711, 0.0
    %v1714 = vmax.f32 %v1712, 0.0
    %1715 = vst [vmem:[#allocation2 + $0x1] sm:$0xff] %v1713
    %1716 = vst [vmem:[#allocation2 + $0x11] sm:$0xff] %v1714
    %v1717 = vld [vmem:[#allocation2] sm:$0xff]
    %v1718 = vld [vmem:[#allocation2 + $0x10] sm:$0xff]
    %v1719 = vld [vmem:[#allocation2 + $0x1] sm:$0xff]
    %v1720 = vld [vmem:[#allocation2 + $0x11] sm:$0xff]
    %v1721 = vld [vmem:[#allocation2 + $0x2] sm:$0xff]
    %v1722 = vld [vmem:[#allocation2 + $0x12] sm:$0xff]
    %v1723 = vpack.c.bf16 %v1718, %v1717
    %v1724 = vpack.c.bf16 %v1720, %v1719
    %v1725 = vpack.c.bf16 %v1722, %v1721
    %v1774 = vunpack.c.l.b16 %v1173
    %v1775 = vunpack.c.l.b16 %v1174
    %v1776 = vunpack.c.l.b16 %v1175
    %v1777 = vunpack.c.l.b16 %v1176
    %v1778 = vunpack.c.l.b16 %v1177
    %v1779 = vunpack.c.l.b16 %v1178
    %v1780 = vunpack.c.l.b16 %v1179
    %v1781 = vunpack.c.l.b16 %v1180
    %v1782 = vunpack.c.l.b16 %v1181
    %v1783 = vunpack.c.l.b16 %v1182
    %v1784 = vunpack.c.l.b16 %v1183
    %v1785 = vunpack.c.l.b16 %v1184
    %v1786 = vunpack.c.l.b16 %v1185
    %v1787 = vunpack.c.l.b16 %v1186
    %v1788 = vunpack.c.l.b16 %v1187
    %v1789 = vunpack.c.l.b16 %v1188
    %v1790 = vunpack.c.l.b16 %v1189
    %v1791 = vunpack.c.l.b16 %v1190
    %v1792 = vunpack.c.l.b16 %v1191
    %v1793 = vunpack.c.l.b16 %v1192
    %v1794 = vunpack.c.l.b16 %v1193
    %v1795 = vunpack.c.l.b16 %v1194
    %v1796 = vunpack.c.l.b16 %v1195
    %v1797 = vunpack.c.l.b16 %v1196
    %v1798 = vunpack.c.l.b16 %v1197
    %v1799 = vunpack.c.l.b16 %v1198
    %v1800 = vunpack.c.l.b16 %v1199
    %v1801 = vunpack.c.l.b16 %v1200
    %v1802 = vunpack.c.l.b16 %v1201
    %v1803 = vunpack.c.l.b16 %v1202
    %v1804 = vunpack.c.l.b16 %v1203
    %v1805 = vunpack.c.l.b16 %v1204
    %v1806 = vunpack.c.l.b16 %v1205
    %v1807 = vunpack.c.l.b16 %v1206
    %v1808 = vunpack.c.l.b16 %v1207
    %v1809 = vunpack.c.l.b16 %v1208
    %v1810 = vunpack.c.l.b16 %v1209
    %v1811 = vunpack.c.l.b16 %v1210
    %v1812 = vunpack.c.l.b16 %v1211
    %v1813 = vunpack.c.l.b16 %v1212
    %v1814 = vunpack.c.l.b16 %v1213
    %v1815 = vunpack.c.l.b16 %v1214
    %v1816 = vunpack.c.l.b16 %v1215
    %v1817 = vunpack.c.l.b16 %v1216
    %v1818 = vunpack.c.l.b16 %v1217
    %v1819 = vunpack.c.l.b16 %v1218
    %v1820 = vunpack.c.l.b16 %v1219
    %v1821 = vunpack.c.l.b16 %v1220
    %v1822 = vpack.c.b16 %v1775, %v1774
    %v1823 = vpack.c.b16 %v1777, %v1776
    %v1824 = vpack.c.b16 %v1779, %v1778
    %v1825 = vpack.c.b16 %v1781, %v1780
    %v1826 = vpack.c.b16 %v1783, %v1782
    %v1827 = vpack.c.b16 %v1785, %v1784
    %v1828 = vpack.c.b16 %v1787, %v1786
    %v1829 = vpack.c.b16 %v1789, %v1788
    %v1830 = vpack.c.b16 %v1791, %v1790
    %v1831 = vpack.c.b16 %v1793, %v1792
    %v1832 = vpack.c.b16 %v1795, %v1794
    %v1833 = vpack.c.b16 %v1797, %v1796
    %v1834 = vpack.c.b16 %v1799, %v1798
    %v1835 = vpack.c.b16 %v1801, %v1800
    %v1836 = vpack.c.b16 %v1803, %v1802
    %v1837 = vpack.c.b16 %v1805, %v1804
    %v1838 = vpack.c.b16 %v1807, %v1806
    %v1839 = vpack.c.b16 %v1809, %v1808
    %v1840 = vpack.c.b16 %v1811, %v1810
    %v1841 = vpack.c.b16 %v1813, %v1812
    %v1842 = vpack.c.b16 %v1815, %v1814
    %v1843 = vpack.c.b16 %v1817, %v1816
    %v1844 = vpack.c.b16 %v1819, %v1818
    %v1845 = vpack.c.b16 %v1821, %v1820
    %1870 = vmatprep.subr.bf16.mxu0 0
    %1871 = vmatpush1.bf16.msra.mxu0 %v1822
    %1872 = vmatprep.subr.bf16.mxu0 0
    %1873 = vmatpush1.bf16.msra.mxu0 %v1823
    %1874 = vmatprep.subr.bf16.mxu0 0
    %1875 = vmatpush1.bf16.msra.mxu0 %v1824
    %1876 = vmatprep.subr.bf16.mxu0 0
    %1877 = vmatpush1.bf16.msra.mxu0 %v1825
    %1878 = vmatprep.subr.bf16.mxu0 0
    %1879 = vmatpush1.bf16.msra.mxu0 %v1826
    %1880 = vmatprep.subr.bf16.mxu0 0
    %1881 = vmatpush1.bf16.msra.mxu0 %v1827
    %1882 = vmatprep.subr.bf16.mxu0 0
    %1883 = vmatpush1.bf16.msra.mxu0 %v1828
    %1884 = vmatprep.subr.bf16.mxu0 0
    %1885 = vmatpush1.bf16.msra.mxu0 %v1829
    %1886 = vmatprep.subr.bf16.mxu0 0
    %1887 = vmatpush1.bf16.msra.mxu0 %v1830
    %1888 = vmatprep.subr.bf16.mxu0 0
    %1889 = vmatpush1.bf16.msra.mxu0 %v1831
    %1890 = vmatprep.subr.bf16.mxu0 0
    %1891 = vmatpush1.bf16.msra.mxu0 %v1832
    %1892 = vmatprep.subr.bf16.mxu0 0
    %1893 = vmatpush1.bf16.msra.mxu0 %v1833
    %1894 = vmatprep.subr.bf16.mxu0 0
    %1895 = vmatpush1.bf16.msra.mxu0 %v1834
    %1896 = vmatprep.subr.bf16.mxu0 0
    %1897 = vmatpush1.bf16.msra.mxu0 %v1835
    %1898 = vmatprep.subr.bf16.mxu0 0
    %1899 = vmatpush1.bf16.msra.mxu0 %v1836
    %1900 = vmatprep.subr.bf16.mxu0 0
    %1901 = vmatpush1.bf16.msra.mxu0 %v1837
    %1902 = vmatprep.mubr.bf16.mxu0 %v1724
    %1903 = vmatmul.mubr.bf16.gmra.mrb[0].mxu0 %v1723
    %v1904 = vpop.f32.mrb[0].mxu0
    %v1905 = vadd.f32 0.0, %v1904
    %v1906 = vpop.f32.mrb[0].mxu0
    %v1907 = vpop.f32.mrb[0].mxu0
    %v1908 = vadd.f32 0.0, %v1907
    %v1909 = vpop.f32.mrb[0].mxu0
    %1910 = vdwg.mxu0
    %1911 = vmatprep.subr.bf16.mxu0 0
    %1912 = vmatpush1.bf16.msra.mxu0 %v1838
    %1913 = vmatprep.subr.bf16.mxu0 0
    %1914 = vmatpush1.bf16.msra.mxu0 %v1839
    %1915 = vmatprep.subr.bf16.mxu0 0
    %1916 = vmatpush1.bf16.msra.mxu0 %v1840
    %1917 = vmatprep.subr.bf16.mxu0 0
    %1918 = vmatpush1.bf16.msra.mxu0 %v1841
    %1919 = vmatprep.subr.bf16.mxu0 0
    %1920 = vmatpush1.bf16.msra.mxu0 %v1842
    %1921 = vmatprep.subr.bf16.mxu0 0
    %1922 = vmatpush1.bf16.msra.mxu0 %v1843
    %1923 = vmatprep.subr.bf16.mxu0 0
    %1924 = vmatpush1.bf16.msra.mxu0 %v1844
    %1925 = vmatprep.subr.bf16.mxu0 0
    %1926 = vmatpush1.bf16.msra.mxu0 %v1845
    %1927 = vmatprep.subr.bf16.mxu0 0
    %1928 = vmatpush1.bf16.msra.mxu0 0
    %1929 = vmatprep.subr.bf16.mxu0 0
    %1930 = vmatpush1.bf16.msra.mxu0 0
    %1931 = vmatprep.subr.bf16.mxu0 0
    %1932 = vmatpush1.bf16.msra.mxu0 0
    %1933 = vmatprep.subr.bf16.mxu0 0
    %1934 = vmatpush1.bf16.msra.mxu0 0
    %1935 = vmatprep.subr.bf16.mxu0 0
    %1936 = vmatpush1.bf16.msra.mxu0 0
    %1937 = vmatprep.subr.bf16.mxu0 0
    %1938 = vmatpush1.bf16.msra.mxu0 0
    %1939 = vmatprep.subr.bf16.mxu0 0
    %1940 = vmatpush1.bf16.msra.mxu0 0
    %1941 = vmatprep.subr.bf16.mxu0 0
    %1942 = vmatpush1.bf16.msra.mxu0 0
    %1943 = vmatprep.mubr.bf16.mxu0 0
    %1944 = vmatmul.mubr.bf16.gmra.mrb[0].mxu0 %v1725
    %v1945 = vpop.f32.mrb[0].mxu0
    %v1946 = vadd.f32 %v1905, %v1945
    %v1947 = vpop.f32.mrb[0].mxu0
    %v1948 = vpop.f32.mrb[0].mxu0
    %v1949 = vadd.f32 %v1908, %v1948
    %v1950 = vpop.f32.mrb[0].mxu0
    %1951 = vdwg.mxu0
    %v1952 = vrot.slane %v1946, 4
    %v1953 = vadd.f32 %v1946, %v1952
    %v1954 = vrot.slane %v1953, 2
    %v1955 = vadd.f32 %v1953, %v1954
    %v1956 = vrot.slane %v1955, 1
    %v1957 = vadd.f32 %v1955, %v1956
    %v1958 = vrot.slane %v1949, 4
    %v1959 = vadd.f32 %v1949, %v1958
    %v1960 = vrot.slane %v1959, 2
    %v1961 = vadd.f32 %v1959, %v1960
    %v1962 = vrot.slane %v1961, 1
    %v1963 = vadd.f32 %v1961, %v1962
    %v1964 = vmul.f32 %v1946, %v1946
    %v1965 = vmul.f32 %v1949, %v1949
    %v1966 = vrot.slane %v1964, 4
    %v1967 = vadd.f32 %v1964, %v1966
    %v1968 = vrot.slane %v1967, 2
    %v1969 = vadd.f32 %v1967, %v1968
    %v1970 = vrot.slane %v1969, 1
    %v1971 = vadd.f32 %v1969, %v1970
    %v1972 = vrot.slane %v1965, 4
    %v1973 = vadd.f32 %v1965, %v1972
    %v1974 = vrot.slane %v1973, 2
    %v1975 = vadd.f32 %v1973, %v1974
    %v1976 = vrot.slane %v1975, 1
    %v1977 = vadd.f32 %v1975, %v1976
    %v1980 = vsel %vm399, %v1963, %v1957
    %v1984 = vsel %vm399, %v1977, %v1971
    %v1986 = vld [vmem:[%s3] sm:$0xff]
    %v1987 = vld [vmem:[%s3 + $0x8] sm:$0xff]
    %v1988 = vld [vmem:[%s3 + $0x10] sm:$0xff]
    %v1989 = vld [vmem:[%s3 + $0x18] sm:$0xff]
    %v1990 = vld [vmem:[%s3 + $0x20] sm:$0xff]
    %v1991 = vld [vmem:[%s3 + $0x28] sm:$0xff]
    %v1992 = vld [vmem:[%s3 + $0x30] sm:$0xff]
    %v1993 = vld [vmem:[%s3 + $0x38] sm:$0xff]
    %v1994 = vld [vmem:[%s3 + $0x40] sm:$0xff]
    %v1995 = vld [vmem:[%s3 + $0x48] sm:$0xff]
    %v1996 = vld [vmem:[%s3 + $0x50] sm:$0xff]
    %v1997 = vld [vmem:[%s3 + $0x58] sm:$0xff]
    %v1998 = vld [vmem:[%s3 + $0x60] sm:$0xff]
    %v1999 = vld [vmem:[%s3 + $0x68] sm:$0xff]
    %v2000 = vld [vmem:[%s3 + $0x70] sm:$0xff]
    %v2001 = vld [vmem:[%s3 + $0x78] sm:$0xff]
    %v2002 = vld [vmem:[%s3 + $0x80] sm:$0xff]
    %v2003 = vld [vmem:[%s3 + $0x88] sm:$0xff]
    %v2004 = vld [vmem:[%s3 + $0x90] sm:$0xff]
    %v2005 = vld [vmem:[%s3 + $0x98] sm:$0xff]
    %v2006 = vld [vmem:[%s3 + $0xa0] sm:$0xff]
    %v2007 = vld [vmem:[%s3 + $0xa8] sm:$0xff]
    %v2008 = vld [vmem:[%s3 + $0xb0] sm:$0xff]
    %v2009 = vld [vmem:[%s3 + $0xb8] sm:$0xff]
    %v2010 = vld [vmem:[%s3 + $0xc0] sm:$0xff]
    %v2011 = vld [vmem:[%s3 + $0xc8] sm:$0xff]
    %v2012 = vld [vmem:[%s3 + $0xd0] sm:$0xff]
    %v2013 = vld [vmem:[%s3 + $0xd8] sm:$0xff]
    %v2014 = vld [vmem:[%s3 + $0xe0] sm:$0xff]
    %v2015 = vld [vmem:[%s3 + $0xe8] sm:$0xff]
    %v2016 = vld [vmem:[%s3 + $0xf0] sm:$0xff]
    %v2017 = vld [vmem:[%s3 + $0xf8] sm:$0xff]
    %v2018 = vld [vmem:[%s3 + $0x100] sm:$0xff]
    %v2019 = vld [vmem:[%s3 + $0x108] sm:$0xff]
    %v2020 = vld [vmem:[%s3 + $0x110] sm:$0xff]
    %v2021 = vld [vmem:[%s3 + $0x118] sm:$0xff]
    %v2022 = vld [vmem:[%s3 + $0x120] sm:$0xff]
    %v2023 = vld [vmem:[%s3 + $0x128] sm:$0xff]
    %v2024 = vld [vmem:[%s3 + $0x130] sm:$0xff]
    %v2025 = vld [vmem:[%s3 + $0x138] sm:$0xff]
    %v2026 = vld [vmem:[%s3 + $0x140] sm:$0xff]
    %v2027 = vld [vmem:[%s3 + $0x148] sm:$0xff]
    %v2028 = vld [vmem:[%s3 + $0x150] sm:$0xff]
    %v2029 = vld [vmem:[%s3 + $0x158] sm:$0xff]
    %v2030 = vld [vmem:[%s3 + $0x160] sm:$0xff]
    %v2031 = vld [vmem:[%s3 + $0x168] sm:$0xff]
    %v2032 = vld [vmem:[%s3 + $0x170] sm:$0xff]
    %v2033 = vld [vmem:[%s3 + $0x178] sm:$0xff]
    %v2034 = vld [vmem:[%s3 + $0x180] sm:$0xff]
    %v2035 = vld [vmem:[%s3 + $0x188] sm:$0xff]
    %v2036 = vld [vmem:[%s3 + $0x190] sm:$0xff]
    %v2037 = vld [vmem:[%s3 + $0x198] sm:$0xff]
    %v2038 = vld [vmem:[%s3 + $0x1a0] sm:$0xff]
    %v2039 = vld [vmem:[%s3 + $0x1a8] sm:$0xff]
    %v2040 = vld [vmem:[%s3 + $0x1b0] sm:$0xff]
    %v2041 = vld [vmem:[%s3 + $0x1b8] sm:$0xff]
    %v2042 = vld [vmem:[%s3 + $0x1c0] sm:$0xff]
    %v2043 = vld [vmem:[%s3 + $0x1c8] sm:$0xff]
    %v2044 = vld [vmem:[%s3 + $0x1d0] sm:$0xff]
    %v2045 = vld [vmem:[%s3 + $0x1d8] sm:$0xff]
    %v2046 = vld [vmem:[%s3 + $0x1e0] sm:$0xff]
    %v2047 = vld [vmem:[%s3 + $0x1e8] sm:$0xff]
    %v2048 = vld [vmem:[%s3 + $0x1f0] sm:$0xff]
    %v2049 = vld [vmem:[%s3 + $0x1f8] sm:$0xff]
    %2050 = vmatprep.subr.mxu0 %v1987
    %2051 = vmatpush1.msra.mxu0 %v1986
    %2052 = vmatprep.subr.mxu0 %v1989
    %2053 = vmatpush1.msra.mxu0 %v1988
    %2054 = vmatprep.subr.mxu0 %v1991
    %2055 = vmatpush1.msra.mxu0 %v1990
    %2056 = vmatprep.subr.mxu0 %v1993
    %2057 = vmatpush1.msra.mxu0 %v1992
    %2058 = vmatprep.subr.mxu0 %v1995
    %2059 = vmatpush1.msra.mxu0 %v1994
    %2060 = vmatprep.subr.mxu0 %v1997
    %2061 = vmatpush1.msra.mxu0 %v1996
    %2062 = vmatprep.subr.mxu0 %v1999
    %2063 = vmatpush1.msra.mxu0 %v1998
    %2064 = vmatprep.subr.mxu0 %v2001
    %2065 = vmatpush1.msra.mxu0 %v2000
    %2066 = vmatprep.subr.mxu0 %v2003
    %2067 = vmatpush1.msra.mxu0 %v2002
    %2068 = vmatprep.subr.mxu0 %v2005
    %2069 = vmatpush1.msra.mxu0 %v2004
    %2070 = vmatprep.subr.mxu0 %v2007
    %2071 = vmatpush1.msra.mxu0 %v2006
    %2072 = vmatprep.subr.mxu0 %v2009
    %2073 = vmatpush1.msra.mxu0 %v2008
    %2074 = vmatprep.subr.mxu0 %v2011
    %2075 = vmatpush1.msra.mxu0 %v2010
    %2076 = vmatprep.subr.mxu0 %v2013
    %2077 = vmatpush1.msra.mxu0 %v2012
    %2078 = vmatprep.subr.mxu0 %v2015
    %2079 = vmatpush1.msra.mxu0 %v2014
    %2080 = vmatprep.subr.mxu0 %v2017
    %2081 = vmatpush1.msra.mxu0 %v2016
    %2082 = vmatprep.subr.mxu0 %v2019
    %2083 = vmatpush1.msra.mxu0 %v2018
    %2084 = vmatprep.subr.mxu0 %v2021
    %2085 = vmatpush1.msra.mxu0 %v2020
    %2086 = vmatprep.subr.mxu0 %v2023
    %2087 = vmatpush1.msra.mxu0 %v2022
    %2088 = vmatprep.subr.mxu0 %v2025
    %2089 = vmatpush1.msra.mxu0 %v2024
    %2090 = vmatprep.subr.mxu0 %v2027
    %2091 = vmatpush1.msra.mxu0 %v2026
    %2092 = vmatprep.subr.mxu0 %v2029
    %2093 = vmatpush1.msra.mxu0 %v2028
    %2094 = vmatprep.subr.mxu0 %v2031
    %2095 = vmatpush1.msra.mxu0 %v2030
    %2096 = vmatprep.subr.mxu0 %v2033
    %2097 = vmatpush1.msra.mxu0 %v2032
    %2098 = vmatprep.subr.mxu0 %v2035
    %2099 = vmatpush1.msra.mxu0 %v2034
    %2100 = vmatprep.subr.mxu0 %v2037
    %2101 = vmatpush1.msra.mxu0 %v2036
    %2102 = vmatprep.subr.mxu0 %v2039
    %2103 = vmatpush1.msra.mxu0 %v2038
    %2104 = vmatprep.subr.mxu0 %v2041
    %2105 = vmatpush1.msra.mxu0 %v2040
    %2106 = vmatprep.subr.mxu0 %v2043
    %2107 = vmatpush1.msra.mxu0 %v2042
    %2108 = vmatprep.subr.mxu0 %v2045
    %2109 = vmatpush1.msra.mxu0 %v2044
    %2110 = vmatprep.subr.mxu0 %v2047
    %2111 = vmatpush1.msra.mxu0 %v2046
    %2112 = vmatprep.subr.mxu0 %v2049
    %2113 = vmatpush1.msra.mxu0 %v2048
    %2114 = vmatprep.mubr.f32.mxu0 %v1984
    %2115 = vmatmul.mubr.f32.gmra.mrb[0].mxu0 %v1980
    %v2116 = vpop.f32.mrb[0].mxu0
    %v2117 = vadd.f32 0.0, %v2116
    %v2118 = vpop.f32.mrb[0].mxu0
    %v2119 = vadd.f32 0.0, %v2118
    %2120 = vdwg.mxu0
    %v2123 = vunpack.c.l.s4 1966171168
    %v2124 = vunpack.c.0.s8 %v2123
    %v2125 = vlaneseq
    %v2126 = vshrl.u32 %v2125, 7
    %v2127 = vsub.s32 %v2124, %v2126
    %v2128 = vrot.slane %v2117, %v2127
    %v2129 = vcombine.high %v2128, %v2128
    %v2131 = vunpack.c.l.s4 1966171168
    %v2132 = vunpack.c.0.s8 %v2131
    %v2133 = vlaneseq
    %v2134 = vshrl.u32 %v2133, 7
    %v2135 = vsub.s32 %v2132, %v2134
    %v2136 = vrot.slane %v2128, %v2135
    %v2138 = vunpack.c.l.s4 1966171168
    %v2139 = vunpack.c.0.s8 %v2138
    %v2140 = vlaneseq
    %v2141 = vshrl.u32 %v2140, 7
    %v2142 = vsub.s32 %v2139, %v2141
    %v2143 = vrot.slane %v2129, %v2142
    %v2148 = vunpack.c.l.s4 1966171168
    %v2149 = vunpack.c.0.s8 %v2148
    %v2150 = vlaneseq
    %v2151 = vshrl.u32 %v2150, 7
    %v2152 = vsub.s32 %v2149, %v2151
    %v2153 = vrot.slane %v2119, %v2152
    %v2154 = vcombine.high %v2153, %v2153
    %v2156 = vunpack.c.l.s4 1966171168
    %v2157 = vunpack.c.0.s8 %v2156
    %v2158 = vlaneseq
    %v2159 = vshrl.u32 %v2158, 7
    %v2160 = vsub.s32 %v2157, %v2159
    %v2161 = vrot.slane %v2153, %v2160
    %v2163 = vunpack.c.l.s4 1966171168
    %v2164 = vunpack.c.0.s8 %v2163
    %v2165 = vlaneseq
    %v2166 = vshrl.u32 %v2165, 7
    %v2167 = vsub.s32 %v2164, %v2166
    %v2168 = vrot.slane %v2154, %v2167
    %v2171 = vmul.f32 %v2136, %v2136
    %v2172 = vmul.f32 %v2143, %v2143
    %v2173 = vsub.f32 %v2161, %v2171
    %v2174 = vsub.f32 %v2168, %v2172
    %v2175 = vmax.f32 %v2173, 0.0
    %v2176 = vmax.f32 %v2174, 0.0
    %v2177 = vlaneseq
    %v2178 = vshrl.u32 %v2177, 7
    %v2179 = vsub.s32 0, %v2178
    %v2180 = vrot.slane %v2136, %v2179
    %v2181 = vlaneseq
    %v2182 = vshrl.u32 %v2181, 7
    %v2183 = vsub.s32 0, %v2182
    %v2184 = vrot.slane %v2143, %v2183
    %v2187 = vsub.f32 %v1946, %v2180
    %v2188 = vsub.f32 %v1949, %v2184
    %v2189 = vadd.f32 %v2175, 1e-05
    %v2190 = vadd.f32 %v2176, 1e-05
    %v2191 = vrsqrt.pop %v2189
    %v2192 = vrsqrt.pop %v2190
    %v2195 = vlaneseq
    %v2196 = vshrl.u32 %v2195, 7
    %v2197 = vsub.s32 0, %v2196
    %v2198 = vrot.slane %v2191, %v2197
    %v2199 = vlaneseq
    %v2200 = vshrl.u32 %v2199, 7
    %v2201 = vsub.s32 0, %v2200
    %v2202 = vrot.slane %v2192, %v2201
    %v2205 = vmul.f32 %v2187, %v2198
    %v2206 = vmul.f32 %v2188, %v2202
    %v2207 = vadd.f32 %v2205, %v1121
    %v2208 = vadd.f32 %v2206, %v1122
    %2209 = vst [vmem:[%s4] sm:$0xff] %v2207
    %2210 = vst [vmem:[%s4 + $0x8] sm:$0xff] %v2208
    // Predicated region
    $region22: #{_resblocks_call.1} parent=1 // pred_check
      _
    $region23: #{_resblocks_call.1} parent=1 // pred_check_branch
      %2212 = sbr.rel (0) target = $region25
    $region24: #{_resblocks_call.1} parent=1 // pred_region
      _
    $region25: #{_resblocks_call.1} parent=1 // pred_fallthru
      _
    // Predicated region
    $region26: #{_resblocks_call.1} parent=1 // pred_check
      _
    $region27: #{_resblocks_call.1} parent=1 // pred_check_branch
      %2214 = sbr.rel (0) target = $region29
    $region28: #{_resblocks_call.1} parent=1 // pred_region
      _
    $region29: #{_resblocks_call.1} parent=1 // pred_fallthru
      _
    %2215 = vsyncpa [#allocation4], 1

</llo_original>
